<compile_context>
chip_gen: v5e
topology: v5e:2x2
jax: 0.10.0
libtpu: 0.0.40
codegen_flags: <defaults>
</compile_context>

<pallas_src>
import jax
import jax.numpy as jnp
from jax.experimental import pallas as pl
from jax.experimental.pallas import tpu as pltpu


def _round_up(n, m):
    return ((n + m - 1) // m) * m


# -----------------------------------------------------------------------------
# Kernel
# -----------------------------------------------------------------------------
def _make_kernel(d0, d1, d2, bias_offsets, out_dtype):
    """Build the fused VAE forward kernel for fixed dims / bias-slab offsets."""
    o_b1, o_b2, o_bh, o_bd1, o_bd2 = bias_offsets

    def kernel(x_ref, z_ref, w1_ref, w2_ref, wh_ref, wd1_ref, wd2_ref, b_ref,
               out_ref):
        f32 = jnp.float32
        bf16 = jnp.bfloat16

        # ---- encoder: Linear + ReLU, Linear + LeakyReLU(0.01) ----
        # x arrives in f32 (no wrapper cast pass); bf16 cast happens here.
        h = jnp.dot(x_ref[...].astype(bf16), w1_ref[...],
                    preferred_element_type=f32)
        h = jnp.maximum(h + b_ref[:, o_b1:o_b1 + d1], 0.0)

        h = jnp.dot(h.astype(bf16), w2_ref[...], preferred_element_type=f32)
        h = h + b_ref[:, o_b2:o_b2 + d2]
        h = jnp.where(h >= 0.0, h, 0.01 * h)

        # ---- fused mu / log_var head: one lane-dense (d2, 2*d2) matmul ----
        mulv = jnp.dot(h.astype(bf16), wh_ref[...], preferred_element_type=f32)
        mulv = mulv + b_ref[:, o_bh:o_bh + 2 * d2]
        out_ref[:, :2 * d2] = mulv.astype(out_dtype)   # lane-aligned slice store

        mu = mulv[:, :d2]
        log_var = mulv[:, d2:]

        # ---- reparametrize: hidden = mu + exp(0.5 * log_var) * z ----
        # NOTE: padded batch rows (if any) also pass through exp() on
        # bias-only activations; finite with any sane init and sliced off in
        # the wrapper, but do not let padded log_var grow unbounded.
        hidden = mu + jnp.exp(0.5 * log_var) * z_ref[...].astype(f32)

        # ---- decoder: Linear + ReLU, Linear ----
        dec = jnp.dot(hidden.astype(bf16), wd1_ref[...],
                      preferred_element_type=f32)
        dec = jnp.maximum(dec + b_ref[:, o_bd1:o_bd1 + d1], 0.0)

        out = jnp.dot(dec.astype(bf16), wd2_ref[...], preferred_element_type=f32)
        out_ref[:, 2 * d2:] = (out + b_ref[:, o_bd2:o_bd2 + d0]).astype(out_dtype)

    return kernel


# -----------------------------------------------------------------------------
# Tile selection
# -----------------------------------------------------------------------------
def _choose_block(B, block_rows):
    """Pick (blk, B_pad). Prefers blk <= block_rows, multiple of 8, that
    divides the 8-rounded batch exactly (no wrapper jnp.pad pass) and keeps
    >= 2 grid blocks when there is enough work (v7x has 2 TensorCores)."""
    B8 = _round_up(max(B, 1), 8)
    target = max(8, _round_up(min(block_rows, B8), 8))
    if B8 >= 32:
        half = _round_up((B8 + 1) // 2, 8)
        target = min(target, half)
    blk = None
    for cand in range(target, 7, -8):
        if B8 % cand == 0:
            blk = cand
            break
    # Reject pathologically small exact divisors (per-step overhead would
    # dominate); fall back to padding with the target block size instead.
    if blk is None or (B8 > 64 and blk < max(64, target // 4)):
        blk = target
    return blk, _round_up(B8, blk)


# -----------------------------------------------------------------------------
# Wrappers
# -----------------------------------------------------------------------------
def vae1_forward_batched(x2d, z, packed, *, block_rows=512,
                         out_dtype=jnp.float32):
    """x2d: (B, d0) rows (each row = one flattened sample), z: (B, d2) noise.
    Returns (mu, log_var, x_out) with shapes (B,d2), (B,d2), (B,d0)."""
    d0, d1, d2 = packed["dims"]
    B, feat = x2d.shape
    assert feat == d0, "flattened input must match shapes[0]"
    assert z.shape == (B, d2)

    blk, B_pad = _choose_block(B, block_rows)
    n_blocks = B_pad // blk

    # Keep inputs in f32 (no wrapper-side bf16 pass); pad only when the chosen
    # block size does not divide B exactly.
    xf = x2d.astype(jnp.float32)
    zf = z.astype(jnp.float32)
    if B_pad != B:
        xf = jnp.pad(xf, ((0, B_pad - B), (0, 0)))
        zf = jnp.pad(zf, ((0, B_pad - B), (0, 0)))

    w1, w2, wh = packed["w1"], packed["w2"], packed["wmulv"]
    wd1, wd2, bias = packed["wd1"], packed["wd2"], packed["bias"]

    n_out = 2 * d2 + d0                      # fused [mu || log_var || recon]
    kernel = _make_kernel(d0, d1, d2, packed["offsets"], out_dtype)

    batched = lambda i: (i, 0)    # block the batch axis
    resident = lambda i: (0, 0)   # same block every step -> stays in VMEM

    # Advisory cost estimate for the XLA scheduler.
    flops = 2 * B_pad * (d0 * d1 + d1 * d2 + d2 * (2 * d2) + d2 * d1 + d1 * d0)
    weight_bytes = 2 * (w1.size + w2.size + wh.size + wd1.size + wd2.size) \
        + 4 * bias.size
    io_bytes = B_pad * (d0 + d2) * 4 \
        + B_pad * n_out * jnp.dtype(out_dtype).itemsize
    cost = pl.CostEstimate(flops=flops, transcendentals=B_pad * d2,
                           bytes_accessed=weight_bytes + io_bytes)

    slab = pl.pallas_call(
        kernel,
        out_shape=jax.ShapeDtypeStruct((B_pad, n_out), out_dtype),
        grid=(n_blocks,),
        in_specs=[
            pl.BlockSpec((blk, d0), batched),      # x rows (f32)
            pl.BlockSpec((blk, d2), batched),      # z rows (f32)
            pl.BlockSpec(w1.shape, resident),      # encoder.0 weight (bf16)
            pl.BlockSpec(w2.shape, resident),      # encoder.2 weight (bf16)
            pl.BlockSpec(wh.shape, resident),      # fused [mu||log_var] head (bf16)
            pl.BlockSpec(wd1.shape, resident),     # decoder.0 weight (bf16)
            pl.BlockSpec(wd2.shape, resident),     # decoder.2 weight (bf16)
            pl.BlockSpec(bias.shape, resident),    # packed f32 bias slab
        ],
        out_specs=pl.BlockSpec((blk, n_out), batched),
        compiler_params=pltpu.CompilerParams(
            dimension_semantics=("parallel",),     # shard batch tiles across v7x TCs
            vmem_limit_bytes=32 * 1024 * 1024,
        ),
        cost_estimate=cost,
    )(xf, zf, w1, w2, wh, wd1, wd2, bias)

    mu = slab[:B, :d2]
    log_var = slab[:B, d2:2 * d2]
    x_out = slab[:B, 2 * d2:]
    return mu, log_var, x_out


def vae1_forward(x, z, packed):
    """Original VAE1.forward semantics: x.view(1, -1) -> (mu, log_var, x_out).
    (For B=1 the fixed pallas_call + weight-DMA cost dominates; a plain XLA
    matmul chain would be as fast — kept on the kernel path for parity.)"""
    x_flat = x.reshape(1, -1)
    return vae1_forward_batched(x_flat, z.reshape(1, -1), packed)


# -----------------------------------------------------------------------------
# Parameters
# -----------------------------------------------------------------------------
def init_params(key, shapes):
    """nn.Linear-style U(-1/sqrt(fan_in), 1/sqrt(fan_in)) init.
    Weights stored as (in_features, out_features); biases as (1, out)."""
    d0, d1, d2 = shapes

    def linear(key, fan_in, fan_out):
        kw, kb = jax.random.split(key)
        bound = 1.0 / jnp.sqrt(float(fan_in))
        w = jax.random.uniform(kw, (fan_in, fan_out), jnp.float32, -bound, bound)
        b = jax.random.uniform(kb, (1, fan_out), jnp.float32, -bound, bound)
        return w, b

    keys = jax.random.split(key, 6)
    w1, b1 = linear(keys[0], d0, d1)     # encoder.0
    w2, b2 = linear(keys[1], d1, d2)     # encoder.2
    wmu, bmu = linear(keys[2], d2, d2)   # hidden2mu
    wlv, blv = linear(keys[3], d2, d2)   # hidden2log_var
    wd1, bd1 = linear(keys[4], d2, d1)   # decoder.0
    wd2, bd2 = linear(keys[5], d1, d0)   # decoder.2
    return dict(w1=w1, b1=b1, w2=w2, b2=b2, wmu=wmu, bmu=bmu,
                wlv=wlv, blv=blv, wd1=wd1, bd1=bd1, wd2=wd2, bd2=bd2)


def pack_params(params, shapes):
    """Kernel-facing layout: bf16 weights, fused mu/log_var head, one
    lane-aligned f32 bias slab (each segment starts at a multiple of 128)."""
    d0, d1, d2 = shapes
    bf16 = jnp.bfloat16

    w1 = params["w1"].astype(bf16)
    w2 = params["w2"].astype(bf16)
    wmulv = jnp.concatenate([params["wmu"], params["wlv"]], axis=1).astype(bf16)
    wd1 = params["wd1"].astype(bf16)
    wd2 = params["wd2"].astype(bf16)

    segs = (
        params["b1"],                                                   # (1, d1)
        params["b2"],                                                   # (1, d2)
        jnp.concatenate([params["bmu"], params["blv"]], axis=1),        # (1, 2*d2)
        params["bd1"],                                                  # (1, d1)
        params["bd2"],                                                  # (1, d0)
    )
    offsets = []
    off = 0
    for s in segs:
        offsets.append(off)
        off += _round_up(s.shape[1], 128)
    slab = jnp.zeros((1, off), jnp.float32)
    for o, s in zip(offsets, segs):
        slab = slab.at[:, o:o + s.shape[1]].set(s.astype(jnp.float32))

    return dict(w1=w1, w2=w2, wmulv=wmulv, wd1=wd1, wd2=wd2,
                bias=slab, offsets=tuple(offsets), dims=(d0, d1, d2))


# -----------------------------------------------------------------------------
# Pure-JAX reference (identical bf16 casts / f32 accumulation as the kernel)
# -----------------------------------------------------------------------------
def ref_forward(x2d, z, packed):
    d0, d1, d2 = packed["dims"]
    o_b1, o_b2, o_bh, o_bd1, o_bd2 = packed["offsets"]
    b = packed["bias"]
    f32 = jnp.float32
    bf16 = jnp.bfloat16

    h = jnp.dot(x2d.astype(bf16), packed["w1"], preferred_element_type=f32)
    h = jnp.maximum(h + b[:, o_b1:o_b1 + d1], 0.0)
    h = jnp.dot(h.astype(bf16), packed["w2"], preferred_element_type=f32)
    h = h + b[:, o_b2:o_b2 + d2]
    h = jnp.where(h >= 0.0, h, 0.01 * h)
    mulv = jnp.dot(h.astype(bf16), packed["wmulv"], preferred_element_type=f32)
    mulv = mulv + b[:, o_bh:o_bh + 2 * d2]
    mu, lv = mulv[:, :d2], mulv[:, d2:]
    hidden = mu + jnp.exp(0.5 * lv) * z.astype(f32)
    dec = jnp.dot(hidden.astype(bf16), packed["wd1"], preferred_element_type=f32)
    dec = jnp.maximum(dec + b[:, o_bd1:o_bd1 + d1], 0.0)
    out = jnp.dot(dec.astype(bf16), packed["wd2"], preferred_element_type=f32)
    out = out + b[:, o_bd2:o_bd2 + d0]
    return mu, lv, out


# -----------------------------------------------------------------------------
# Demo / check
# -----------------------------------------------------------------------------
if __name__ == "__main__":
    shapes = (256, 128, 64)          # VAE1 shapes kwarg: [d0, d1, d2]
    d0, d1, d2 = shapes

    key = jax.random.PRNGKey(0)
    k_param, k_x, k_z, k_x1, k_z1 = jax.random.split(key, 5)

    params = init_params(k_param, shapes)
    packed = pack_params(params, shapes)

    # ---- batched path: 512 samples, each a (4, 64) tensor flattened to d0=256.
    # 512 rows -> two 256-row tiles (no pad pass, both v7x TCs busy). ----
    B = 512
    x = jax.random.normal(k_x, (B, 4, 64), jnp.float32)
    x2d = x.reshape(B, -1)
    z = jax.random.normal(k_z, (B, d2), jnp.float32)   # torch.randn_like(sigma) noise

    mu, log_var, x_out = vae1_forward_batched(x2d, z, packed, block_rows=512)
    jax.block_until_ready((mu, log_var, x_out))

    mu_r, lv_r, out_r = ref_forward(x2d, z, packed)
    assert mu.shape == (B, d2) and log_var.shape == (B, d2) and x_out.shape == (B, d0)
    assert jnp.allclose(mu, mu_r, atol=2e-3, rtol=2e-3)
    assert jnp.allclose(log_var, lv_r, atol=2e-3, rtol=2e-3)
    assert jnp.allclose(x_out, out_r, atol=5e-3, rtol=5e-3)

    # ---- single-sample path: exact VAE1.forward semantics (x.view(1, -1)) ----
    x1 = jax.random.normal(k_x1, (4, 64), jnp.float32)
    z1 = jax.random.normal(k_z1, (1, d2), jnp.float32)
    mu1, lv1, out1 = vae1_forward(x1, z1, packed)
    jax.block_until_ready((mu1, lv1, out1))

    mu1_r, lv1_r, out1_r = ref_forward(x1.reshape(1, -1), z1, packed)
    assert mu1.shape == (1, d2) and lv1.shape == (1, d2) and out1.shape == (1, d0)
    assert jnp.allclose(mu1, mu1_r, atol=2e-3, rtol=2e-3)
    assert jnp.allclose(lv1, lv1_r, atol=2e-3, rtol=2e-3)
    assert jnp.allclose(out1, out1_r, atol=5e-3, rtol=5e-3)

    print("KERNEL_OK")
</pallas_src>

<mosaic_0001>
module attributes {stable_mosaic.version = 11 : i64} {
  func.func @kernel(%arg0: i32, %arg1: memref<256x256xf32, #tpu.memory_space<vmem>>, %arg2: memref<256x64xf32, #tpu.memory_space<vmem>>, %arg3: memref<256x128xbf16, #tpu.memory_space<vmem>>, %arg4: memref<128x64xbf16, #tpu.memory_space<vmem>>, %arg5: memref<64x128xbf16, #tpu.memory_space<vmem>>, %arg6: memref<64x128xbf16, #tpu.memory_space<vmem>>, %arg7: memref<128x256xbf16, #tpu.memory_space<vmem>>, %arg8: memref<1x768xf32, #tpu.memory_space<vmem>>, %arg9: memref<256x384xf32, #tpu.memory_space<vmem>>) attributes {dimension_semantics = [#tpu.dimension_semantics<parallel>], iteration_bounds = array<i64: 2>, scalar_prefetch = 0 : i64, scratch_operands = 0 : i64, tpu.core_type = #tpu.core_type<tc>, window_params = [{transform_indices = @transform_0, window_bounds = array<i64: 256, 256>}, {transform_indices = @transform_1, window_bounds = array<i64: 256, 64>}, {pipeline_mode = #tpu.pipeline_mode<synchronous>, transform_indices = @transform_2, window_bounds = array<i64: 256, 128>}, {pipeline_mode = #tpu.pipeline_mode<synchronous>, transform_indices = @transform_3, window_bounds = array<i64: 128, 64>}, {pipeline_mode = #tpu.pipeline_mode<synchronous>, transform_indices = @transform_4, window_bounds = array<i64: 64, 128>}, {pipeline_mode = #tpu.pipeline_mode<synchronous>, transform_indices = @transform_5, window_bounds = array<i64: 64, 128>}, {pipeline_mode = #tpu.pipeline_mode<synchronous>, transform_indices = @transform_6, window_bounds = array<i64: 128, 256>}, {pipeline_mode = #tpu.pipeline_mode<synchronous>, transform_indices = @transform_7, window_bounds = array<i64: 1, 768>}, {transform_indices = @transform_8, window_bounds = array<i64: 256, 384>}]} {
    %c0 = arith.constant 0 : index
    %c0_0 = arith.constant 0 : index
    %0 = vector.load %arg1[%c0, %c0_0] : memref<256x256xf32, #tpu.memory_space<vmem>>, vector<256x256xf32>
    %1 = arith.truncf %0 : vector<256x256xf32> to vector<256x256xbf16>
    %c0_1 = arith.constant 0 : index
    %c0_2 = arith.constant 0 : index
    %2 = vector.load %arg3[%c0_1, %c0_2] : memref<256x128xbf16, #tpu.memory_space<vmem>>, vector<256x128xbf16>
    %cst = arith.constant dense<0.000000e+00> : vector<256x128xf32>
    %3 = tpu.matmul %1, %2, %cst {dimension_numbers = #tpu.dot_dimension_numbers<[1], [0], [0], [1], [0, 0, 1, 1], [], []>} : vector<256x256xbf16>, vector<256x128xbf16>, vector<256x128xf32> -> vector<256x128xf32>
    %c0_3 = arith.constant 0 : index
    %c0_4 = arith.constant 0 : index
    %4 = vector.load %arg8[%c0_3, %c0_4] : memref<1x768xf32, #tpu.memory_space<vmem>>, vector<1x128xf32>
    %5 = vector.broadcast %4 : vector<1x128xf32> to vector<256x128xf32>
    %6 = arith.addf %3, %5 : vector<256x128xf32>
    %cst_5 = arith.constant 0.000000e+00 : f32
    %7 = vector.broadcast %cst_5 : f32 to vector<256x128xf32>
    %8 = arith.maximumf %6, %7 : vector<256x128xf32>
    %9 = arith.truncf %8 : vector<256x128xf32> to vector<256x128xbf16>
    %c0_6 = arith.constant 0 : index
    %c0_7 = arith.constant 0 : index
    %10 = vector.load %arg4[%c0_6, %c0_7] : memref<128x64xbf16, #tpu.memory_space<vmem>>, vector<128x64xbf16>
    %cst_8 = arith.constant dense<0.000000e+00> : vector<256x64xf32>
    %11 = tpu.matmul %9, %10, %cst_8 {dimension_numbers = #tpu.dot_dimension_numbers<[1], [0], [0], [1], [0, 0, 1, 1], [], []>} : vector<256x128xbf16>, vector<128x64xbf16>, vector<256x64xf32> -> vector<256x64xf32>
    %c0_9 = arith.constant 0 : index
    %c128 = arith.constant 128 : index
    %12 = vector.load %arg8[%c0_9, %c128] : memref<1x768xf32, #tpu.memory_space<vmem>>, vector<1x64xf32>
    %13 = vector.broadcast %12 : vector<1x64xf32> to vector<256x64xf32>
    %14 = arith.addf %11, %13 : vector<256x64xf32>
    %cst_10 = arith.constant 0.000000e+00 : f32
    %15 = vector.broadcast %cst_10 : f32 to vector<256x64xf32>
    %16 = arith.cmpf oge, %14, %15 : vector<256x64xf32>
    %cst_11 = arith.constant 0.00999999977 : f32
    %17 = vector.broadcast %cst_11 : f32 to vector<256x64xf32>
    %18 = arith.mulf %17, %14 : vector<256x64xf32>
    %19 = arith.select %16, %14, %18 : vector<256x64xi1>, vector<256x64xf32>
    %20 = arith.truncf %19 : vector<256x64xf32> to vector<256x64xbf16>
    %c0_12 = arith.constant 0 : index
    %c0_13 = arith.constant 0 : index
    %21 = vector.load %arg5[%c0_12, %c0_13] : memref<64x128xbf16, #tpu.memory_space<vmem>>, vector<64x128xbf16>
    %cst_14 = arith.constant dense<0.000000e+00> : vector<256x128xf32>
    %22 = tpu.matmul %20, %21, %cst_14 {dimension_numbers = #tpu.dot_dimension_numbers<[1], [0], [0], [1], [0, 0, 1, 1], [], []>} : vector<256x64xbf16>, vector<64x128xbf16>, vector<256x128xf32> -> vector<256x128xf32>
    %c0_15 = arith.constant 0 : index
    %c256 = arith.constant 256 : index
    %23 = vector.load %arg8[%c0_15, %c256] : memref<1x768xf32, #tpu.memory_space<vmem>>, vector<1x128xf32>
    %24 = vector.broadcast %23 : vector<1x128xf32> to vector<256x128xf32>
    %25 = arith.addf %22, %24 : vector<256x128xf32>
    %c0_16 = arith.constant 0 : index
    %c0_17 = arith.constant 0 : index
    %26 = vector.load %arg9[%c0_16, %c0_17] : memref<256x384xf32, #tpu.memory_space<vmem>>, vector<256x128xf32>
    tpu.vector_store %arg9[%c0_16, %c0_17], %25 {strides = array<i32>} : memref<256x384xf32, #tpu.memory_space<vmem>>, vector<256x128xf32>,
    %27 = vector.extract_strided_slice %25 {offsets = [0, 0], sizes = [256, 64], strides = [1, 1]} : vector<256x128xf32> to vector<256x64xf32>
    %28 = vector.extract_strided_slice %25 {offsets = [0, 64], sizes = [256, 64], strides = [1, 1]} : vector<256x128xf32> to vector<256x64xf32>
    %cst_18 = arith.constant 5.000000e-01 : f32
    %29 = vector.broadcast %cst_18 : f32 to vector<256x64xf32>
    %30 = arith.mulf %29, %28 : vector<256x64xf32>
    %31 = math.exp %30 : vector<256x64xf32>
    %c0_19 = arith.constant 0 : index
    %c0_20 = arith.constant 0 : index
    %32 = vector.load %arg2[%c0_19, %c0_20] : memref<256x64xf32, #tpu.memory_space<vmem>>, vector<256x64xf32>
    %33 = arith.mulf %31, %32 : vector<256x64xf32>
    %34 = arith.addf %27, %33 : vector<256x64xf32>
    %35 = arith.truncf %34 : vector<256x64xf32> to vector<256x64xbf16>
    %c0_21 = arith.constant 0 : index
    %c0_22 = arith.constant 0 : index
    %36 = vector.load %arg6[%c0_21, %c0_22] : memref<64x128xbf16, #tpu.memory_space<vmem>>, vector<64x128xbf16>
    %cst_23 = arith.constant dense<0.000000e+00> : vector<256x128xf32>
    %37 = tpu.matmul %35, %36, %cst_23 {dimension_numbers = #tpu.dot_dimension_numbers<[1], [0], [0], [1], [0, 0, 1, 1], [], []>} : vector<256x64xbf16>, vector<64x128xbf16>, vector<256x128xf32> -> vector<256x128xf32>
    %c0_24 = arith.constant 0 : index
    %c384 = arith.constant 384 : index
    %38 = vector.load %arg8[%c0_24, %c384] : memref<1x768xf32, #tpu.memory_space<vmem>>, vector<1x128xf32>
    %39 = vector.broadcast %38 : vector<1x128xf32> to vector<256x128xf32>
    %40 = arith.addf %37, %39 : vector<256x128xf32>
    %cst_25 = arith.constant 0.000000e+00 : f32
    %41 = vector.broadcast %cst_25 : f32 to vector<256x128xf32>
    %42 = arith.maximumf %40, %41 : vector<256x128xf32>
    %43 = arith.truncf %42 : vector<256x128xf32> to vector<256x128xbf16>
    %c0_26 = arith.constant 0 : index
    %c0_27 = arith.constant 0 : index
    %44 = vector.load %arg7[%c0_26, %c0_27] : memref<128x256xbf16, #tpu.memory_space<vmem>>, vector<128x256xbf16>
    %cst_28 = arith.constant dense<0.000000e+00> : vector<256x256xf32>
    %45 = tpu.matmul %43, %44, %cst_28 {dimension_numbers = #tpu.dot_dimension_numbers<[1], [0], [0], [1], [0, 0, 1, 1], [], []>} : vector<256x128xbf16>, vector<128x256xbf16>, vector<256x256xf32> -> vector<256x256xf32>
    %c0_29 = arith.constant 0 : index
    %c512 = arith.constant 512 : index
    %46 = vector.load %arg8[%c0_29, %c512] : memref<1x768xf32, #tpu.memory_space<vmem>>, vector<1x256xf32>
    %47 = vector.broadcast %46 : vector<1x256xf32> to vector<256x256xf32>
    %48 = arith.addf %45, %47 : vector<256x256xf32>
    %c0_30 = arith.constant 0 : index
    %c128_31 = arith.constant 128 : index
    %49 = vector.load %arg9[%c0_30, %c128_31] : memref<256x384xf32, #tpu.memory_space<vmem>>, vector<256x256xf32>
    tpu.vector_store %arg9[%c0_30, %c128_31], %48 {strides = array<i32>} : memref<256x384xf32, #tpu.memory_space<vmem>>, vector<256x256xf32>,
    return
  }
  func.func @transform_0(%arg0: i32) -> (i32, i32) {
    %c0_i32 = arith.constant 0 : i32
    %c0_i32_0 = arith.constant 0 : i32
    return %arg0, %c0_i32 : i32, i32
  }
  func.func @transform_1(%arg0: i32) -> (i32, i32) {
    %c0_i32 = arith.constant 0 : i32
    %c0_i32_0 = arith.constant 0 : i32
    return %arg0, %c0_i32 : i32, i32
  }
  func.func @transform_2(%arg0: i32) -> (i32, i32) {
    %c0_i32 = arith.constant 0 : i32
    %c0_i32_0 = arith.constant 0 : i32
    %c0_i32_1 = arith.constant 0 : i32
    return %c0_i32, %c0_i32_0 : i32, i32
  }
  func.func @transform_3(%arg0: i32) -> (i32, i32) {
    %c0_i32 = arith.constant 0 : i32
    %c0_i32_0 = arith.constant 0 : i32
    %c0_i32_1 = arith.constant 0 : i32
    return %c0_i32, %c0_i32_0 : i32, i32
  }
  func.func @transform_4(%arg0: i32) -> (i32, i32) {
    %c0_i32 = arith.constant 0 : i32
    %c0_i32_0 = arith.constant 0 : i32
    %c0_i32_1 = arith.constant 0 : i32
    return %c0_i32, %c0_i32_0 : i32, i32
  }
  func.func @transform_5(%arg0: i32) -> (i32, i32) {
    %c0_i32 = arith.constant 0 : i32
    %c0_i32_0 = arith.constant 0 : i32
    %c0_i32_1 = arith.constant 0 : i32
    return %c0_i32, %c0_i32_0 : i32, i32
  }
  func.func @transform_6(%arg0: i32) -> (i32, i32) {
    %c0_i32 = arith.constant 0 : i32
    %c0_i32_0 = arith.constant 0 : i32
    %c0_i32_1 = arith.constant 0 : i32
    return %c0_i32, %c0_i32_0 : i32, i32
  }
  func.func @transform_7(%arg0: i32) -> (i32, i32) {
    %c0_i32 = arith.constant 0 : i32
    %c0_i32_0 = arith.constant 0 : i32
    %c0_i32_1 = arith.constant 0 : i32
    return %c0_i32, %c0_i32_0 : i32, i32
  }
  func.func @transform_8(%arg0: i32) -> (i32, i32) {
    %c0_i32 = arith.constant 0 : i32
    %c0_i32_0 = arith.constant 0 : i32
    return %arg0, %c0_i32 : i32, i32
  }
}

</mosaic_0001>

<llo_original>
// kernel: tpu_custom_call.1
$region0: #{tpu_custom_call.1}
  #allocation0 [shape = 'u32[]', space=smem, size = 0x4, offset = 0x4, fixed_abs, tag = 'smem constant byte address 0x4 - core index']
  #allocation1 [shape = 'u32[72,128]{1,0:T(1,128)}', space=vmem, size = 0x9000, scoped, tag = 'internal scratch']
  %s0 = inlined_call_operand.hbm [shape: f32[512,256], index: 0, kind: input, shape index: {}]
  %s1 = inlined_call_operand.vmem [shape: f32[512,64], index: 1, kind: input, shape index: {}]
  %s2 = inlined_call_operand.vmem [shape: bf16[256,128], index: 2, kind: input, shape index: {}]
  %s3 = inlined_call_operand.vmem [shape: bf16[128,64], index: 3, kind: input, shape index: {}]
  %s4 = inlined_call_operand.vmem [shape: bf16[64,128], index: 4, kind: input, shape index: {}]
  %s5 = inlined_call_operand.vmem [shape: bf16[64,128], index: 5, kind: input, shape index: {}]
  %s6 = inlined_call_operand.vmem [shape: bf16[128,256], index: 6, kind: input, shape index: {}]
  %s7 = inlined_call_operand.vmem [shape: f32[1,768], index: 7, kind: input, shape index: {}]
  %s8 = inlined_call_operand.hbm [shape: f32[512,384], index: 8, kind: output, shape index: {}]
  %s9 = sld [smem:[#allocation0]]
  $region69: #{tpu_custom_call.1} parent=0
    _
  %s11 = ssub.s32 1, %s9
  %s12 = scalar_select 0, %s11, %s9
  $region1: #{tpu_custom_call.1} parent=0
    #allocation2 [shape = 'u8[524288]{0}', space=vmem, size = 0x80000, scoped, tag = 'input window, operand 0']
    #allocation3 [shape = 's32[2]{0}', space=sflag, size = 0x8, scoped, tag = 'scoped memory for tpu_custom_call.1']
    #allocation4 [shape = 's32[2]{0}', space=sflag, size = 0x8, scoped, tag = 'scoped memory for tpu_custom_call.1']
    #allocation5 [shape = 'u8[786432]{0}', space=vmem, size = 0xc0000, scoped, tag = 'output window, operand 0']
    %13 = vsyncpa [#allocation3], 0
    %s14 = scalar_lea.sflag [#allocation3], 1
    %15 = vsyncpa %s14, 0
    %16 = vsyncpa [#allocation4], 0
    %s17 = scalar_lea.sflag [#allocation4], 1
    %18 = vsyncpa %s17, 0
    loop: start=0, step=1, limit=4
    $region2: #{tpu_custom_call.1} parent=1 // loop_pre_header
      _
    $region3: #{tpu_custom_call.1} parent=1 // loop_header
      %s20 = sphi 0, %s24
      %p21 = scmp.ge.s32.totalorder %s20, 4
      %s30 = sphi 0, %s32
      %s33 = sphi 0, %s30
      %s34 = sphi 0, %s33
      %s50 = sphi 0, %s34
      %s56 = sphi 0, %s58
      %s59 = sphi 0, %s56
      %s60 = sphi 0, %s59
      %s76 = sphi 0, %s60
      %s80 = sphi 0, %s80
      %s82 = sphi 0, %s80
      %s83 = sphi 0, %s82
      %s97 = sphi 0, %s83
      %s101 = sphi 0, %s101
      %s103 = sphi 0, %s101
      %s104 = sphi 0, %s103
      %s118 = sphi 0, %s104
      %s122 = sphi 0, %s122
      %s124 = sphi 0, %s122
      %s125 = sphi 0, %s124
      %s139 = sphi 0, %s125
      %s143 = sphi 0, %s143
      %s145 = sphi 0, %s143
      %s146 = sphi 0, %s145
      %s160 = sphi 0, %s146
      %s164 = sphi 0, %s164
      %s166 = sphi 0, %s164
      %s167 = sphi 0, %s166
      %s181 = sphi 0, %s167
      %s185 = sphi 0, %s185
      %s187 = sphi 0, %s185
      %s188 = sphi 0, %s187
      %s202 = sphi 0, %s188
      %s208 = sphi 0, %s210
      %s211 = sphi 0, %s208
      %s212 = sphi 0, %s211
      %s228 = sphi 0, %s212
    $region4: #{tpu_custom_call.1} parent=1 // loop_header_branch
      %23 = sbr.rel (%p21) target = $region8
    $region5: #{tpu_custom_call.1} parent=1 // loop_body
      %s25 = ssub.s32 %s20, 1
      %s26 = ssub.s32 %s20, 2
      %s27 = sadd.s32 %s20, 1
      %s28 = ssub.s32 %s20, %s27
      %p29 = scmp.eq.s32.totalorder %s28, 0
      %s31 = sadd.s32 %s30, 1
      %s32 = scalar_select %p29, %s30, %s31
      %p35 = pneg %p29
      %p36 = scmp.eq.s32.totalorder %s20, 1
      %p37 = por %p35, %p36
      %p38 = scmp.ne.s32.totalorder %s30, %s33
      %p39 = scmp.eq.s32.totalorder %s20, 0
      %p40 = por %p38, %p39
      %p41 = scmp.ne.s32.totalorder %s30, %s33
      %p42 = scmp.eq.s32.totalorder %s25, 1
      %p43 = por %p41, %p42
      %p44 = scmp.ne.s32.totalorder %s33, %s34
      %p45 = scmp.eq.s32.totalorder %s25, 0
      %p46 = por %p44, %p45
      %p47 = scmp.ne.s32.totalorder %s33, %s34
      %p48 = scmp.eq.s32.totalorder %s26, 1
      %p49 = por %p47, %p48
      %p51 = scmp.ne.s32.totalorder %s34, %s50
      %p52 = scmp.eq.s32.totalorder %s26, 0
      %p53 = por %p51, %p52
      %s54 = ssub.s32 %s20, %s27
      %p55 = scmp.eq.s32.totalorder %s54, 0
      %s57 = sadd.s32 %s56, 1
      %s58 = scalar_select %p55, %s56, %s57
      %p61 = pneg %p55
      %p62 = scmp.eq.s32.totalorder %s20, 1
      %p63 = por %p61, %p62
      %p64 = scmp.ne.s32.totalorder %s56, %s59
      %p65 = scmp.eq.s32.totalorder %s20, 0
      %p66 = por %p64, %p65
      %p67 = scmp.ne.s32.totalorder %s56, %s59
      %p68 = scmp.eq.s32.totalorder %s25, 1
      %p69 = por %p67, %p68
      %p70 = scmp.ne.s32.totalorder %s59, %s60
      %p71 = scmp.eq.s32.totalorder %s25, 0
      %p72 = por %p70, %p71
      %p73 = scmp.ne.s32.totalorder %s59, %s60
      %p74 = scmp.eq.s32.totalorder %s26, 1
      %p75 = por %p73, %p74
      %p77 = scmp.ne.s32.totalorder %s60, %s76
      %p78 = scmp.eq.s32.totalorder %s26, 0
      %p79 = por %p77, %p78
      %s81 = sadd.s32 %s80, 1
      %p84 = scmp.eq.s32.totalorder %s20, 1
      %p85 = scmp.ne.s32.totalorder %s80, %s82
      %p86 = scmp.eq.s32.totalorder %s20, 0
      %p87 = por %p85, %p86
      %p88 = scmp.ne.s32.totalorder %s80, %s82
      %p89 = scmp.eq.s32.totalorder %s25, 1
      %p90 = por %p88, %p89
      %p91 = scmp.ne.s32.totalorder %s82, %s83
      %p92 = scmp.eq.s32.totalorder %s25, 0
      %p93 = por %p91, %p92
      %p94 = scmp.ne.s32.totalorder %s82, %s83
      %p95 = scmp.eq.s32.totalorder %s26, 1
      %p96 = por %p94, %p95
      %p98 = scmp.ne.s32.totalorder %s83, %s97
      %p99 = scmp.eq.s32.totalorder %s26, 0
      %p100 = por %p98, %p99
      %s102 = sadd.s32 %s101, 1
      %p105 = scmp.eq.s32.totalorder %s20, 1
      %p106 = scmp.ne.s32.totalorder %s101, %s103
      %p107 = scmp.eq.s32.totalorder %s20, 0
      %p108 = por %p106, %p107
      %p109 = scmp.ne.s32.totalorder %s101, %s103
      %p110 = scmp.eq.s32.totalorder %s25, 1
      %p111 = por %p109, %p110
      %p112 = scmp.ne.s32.totalorder %s103, %s104
      %p113 = scmp.eq.s32.totalorder %s25, 0
      %p114 = por %p112, %p113
      %p115 = scmp.ne.s32.totalorder %s103, %s104
      %p116 = scmp.eq.s32.totalorder %s26, 1
      %p117 = por %p115, %p116
      %p119 = scmp.ne.s32.totalorder %s104, %s118
      %p120 = scmp.eq.s32.totalorder %s26, 0
      %p121 = por %p119, %p120
      %s123 = sadd.s32 %s122, 1
      %p126 = scmp.eq.s32.totalorder %s20, 1
      %p127 = scmp.ne.s32.totalorder %s122, %s124
      %p128 = scmp.eq.s32.totalorder %s20, 0
      %p129 = por %p127, %p128
      %p130 = scmp.ne.s32.totalorder %s122, %s124
      %p131 = scmp.eq.s32.totalorder %s25, 1
      %p132 = por %p130, %p131
      %p133 = scmp.ne.s32.totalorder %s124, %s125
      %p134 = scmp.eq.s32.totalorder %s25, 0
      %p135 = por %p133, %p134
      %p136 = scmp.ne.s32.totalorder %s124, %s125
      %p137 = scmp.eq.s32.totalorder %s26, 1
      %p138 = por %p136, %p137
      %p140 = scmp.ne.s32.totalorder %s125, %s139
      %p141 = scmp.eq.s32.totalorder %s26, 0
      %p142 = por %p140, %p141
      %s144 = sadd.s32 %s143, 1
      %p147 = scmp.eq.s32.totalorder %s20, 1
      %p148 = scmp.ne.s32.totalorder %s143, %s145
      %p149 = scmp.eq.s32.totalorder %s20, 0
      %p150 = por %p148, %p149
      %p151 = scmp.ne.s32.totalorder %s143, %s145
      %p152 = scmp.eq.s32.totalorder %s25, 1
      %p153 = por %p151, %p152
      %p154 = scmp.ne.s32.totalorder %s145, %s146
      %p155 = scmp.eq.s32.totalorder %s25, 0
      %p156 = por %p154, %p155
      %p157 = scmp.ne.s32.totalorder %s145, %s146
      %p158 = scmp.eq.s32.totalorder %s26, 1
      %p159 = por %p157, %p158
      %p161 = scmp.ne.s32.totalorder %s146, %s160
      %p162 = scmp.eq.s32.totalorder %s26, 0
      %p163 = por %p161, %p162
      %s165 = sadd.s32 %s164, 1
      %p168 = scmp.eq.s32.totalorder %s20, 1
      %p169 = scmp.ne.s32.totalorder %s164, %s166
      %p170 = scmp.eq.s32.totalorder %s20, 0
      %p171 = por %p169, %p170
      %p172 = scmp.ne.s32.totalorder %s164, %s166
      %p173 = scmp.eq.s32.totalorder %s25, 1
      %p174 = por %p172, %p173
      %p175 = scmp.ne.s32.totalorder %s166, %s167
      %p176 = scmp.eq.s32.totalorder %s25, 0
      %p177 = por %p175, %p176
      %p178 = scmp.ne.s32.totalorder %s166, %s167
      %p179 = scmp.eq.s32.totalorder %s26, 1
      %p180 = por %p178, %p179
      %p182 = scmp.ne.s32.totalorder %s167, %s181
      %p183 = scmp.eq.s32.totalorder %s26, 0
      %p184 = por %p182, %p183
      %s186 = sadd.s32 %s185, 1
      %p189 = scmp.eq.s32.totalorder %s20, 1
      %p190 = scmp.ne.s32.totalorder %s185, %s187
      %p191 = scmp.eq.s32.totalorder %s20, 0
      %p192 = por %p190, %p191
      %p193 = scmp.ne.s32.totalorder %s185, %s187
      %p194 = scmp.eq.s32.totalorder %s25, 1
      %p195 = por %p193, %p194
      %p196 = scmp.ne.s32.totalorder %s187, %s188
      %p197 = scmp.eq.s32.totalorder %s25, 0
      %p198 = por %p196, %p197
      %p199 = scmp.ne.s32.totalorder %s187, %s188
      %p200 = scmp.eq.s32.totalorder %s26, 1
      %p201 = por %p199, %p200
      %p203 = scmp.ne.s32.totalorder %s188, %s202
      %p204 = scmp.eq.s32.totalorder %s26, 0
      %p205 = por %p203, %p204
      %s206 = ssub.s32 %s20, %s27
      %p207 = scmp.eq.s32.totalorder %s206, 0
      %s209 = sadd.s32 %s208, 1
      %s210 = scalar_select %p207, %s208, %s209
      %p213 = pneg %p207
      %p214 = scmp.eq.s32.totalorder %s20, 1
      %p215 = por %p213, %p214
      %p216 = scmp.ne.s32.totalorder %s208, %s211
      %p217 = scmp.eq.s32.totalorder %s20, 0
      %p218 = por %p216, %p217
      %p219 = scmp.ne.s32.totalorder %s208, %s211
      %p220 = scmp.eq.s32.totalorder %s25, 1
      %p221 = por %p219, %p220
      %p222 = scmp.ne.s32.totalorder %s211, %s212
      %p223 = scmp.eq.s32.totalorder %s25, 0
      %p224 = por %p222, %p223
      %p225 = scmp.ne.s32.totalorder %s211, %s212
      %p226 = scmp.eq.s32.totalorder %s26, 1
      %p227 = por %p225, %p226
      %p229 = scmp.ne.s32.totalorder %s212, %s228
      %p230 = scmp.eq.s32.totalorder %s26, 0
      %p231 = por %p229, %p230
      %p232 = scmp.le.s32.totalorder 1, %s20
      %p233 = scmp.lt.s32.totalorder %s20, 3
      %p234 = pnand %p232, %p233
      %p235 = pneg %p234
      // Predicated region
      $region9: #{tpu_custom_call.1} parent=5 // pred_check
        _
      $region10: #{tpu_custom_call.1} parent=5 // pred_check_branch
        %237 = sbr.rel (%p234) target = $region12
      $region11: #{tpu_custom_call.1} parent=5 // pred_region
        %s238 = ssub.s32 %s20, 1
        // Predicated region
        $region13: #{tpu_custom_call.1} parent=11 // pred_check
          %p239 = pneg %p93
        $region14: #{tpu_custom_call.1} parent=11 // pred_check_branch
          %241 = sbr.rel (%p239) target = $region16
        $region15: #{tpu_custom_call.1} parent=11 // pred_region
          _
        $region16: #{tpu_custom_call.1} parent=11 // pred_fallthru
          _
        // Predicated region
        $region17: #{tpu_custom_call.1} parent=11 // pred_check
          %p242 = pneg %p114
        $region18: #{tpu_custom_call.1} parent=11 // pred_check_branch
          %244 = sbr.rel (%p242) target = $region20
        $region19: #{tpu_custom_call.1} parent=11 // pred_region
          _
        $region20: #{tpu_custom_call.1} parent=11 // pred_fallthru
          _
        // Predicated region
        $region21: #{tpu_custom_call.1} parent=11 // pred_check
          %p245 = pneg %p135
        $region22: #{tpu_custom_call.1} parent=11 // pred_check_branch
          %247 = sbr.rel (%p245) target = $region24
        $region23: #{tpu_custom_call.1} parent=11 // pred_region
          _
        $region24: #{tpu_custom_call.1} parent=11 // pred_fallthru
          _
        // Predicated region
        $region25: #{tpu_custom_call.1} parent=11 // pred_check
          %p248 = pneg %p156
        $region26: #{tpu_custom_call.1} parent=11 // pred_check_branch
          %250 = sbr.rel (%p248) target = $region28
        $region27: #{tpu_custom_call.1} parent=11 // pred_region
          _
        $region28: #{tpu_custom_call.1} parent=11 // pred_fallthru
          _
        // Predicated region
        $region29: #{tpu_custom_call.1} parent=11 // pred_check
          %p251 = pneg %p177
        $region30: #{tpu_custom_call.1} parent=11 // pred_check_branch
          %253 = sbr.rel (%p251) target = $region32
        $region31: #{tpu_custom_call.1} parent=11 // pred_region
          _
        $region32: #{tpu_custom_call.1} parent=11 // pred_fallthru
          _
        // Predicated region
        $region33: #{tpu_custom_call.1} parent=11 // pred_check
          %p254 = pneg %p198
        $region34: #{tpu_custom_call.1} parent=11 // pred_check_branch
          %256 = sbr.rel (%p254) target = $region36
        $region35: #{tpu_custom_call.1} parent=11 // pred_region
          _
        $region36: #{tpu_custom_call.1} parent=11 // pred_fallthru
          _
      $region12: #{tpu_custom_call.1} parent=5 // pred_fallthru
        _
      %p257 = scmp.lt.s32.totalorder %s20, 2
      // Predicated region
      $region37: #{tpu_custom_call.1} parent=5 // pred_check
        %p258 = pneg %p257
      $region38: #{tpu_custom_call.1} parent=5 // pred_check_branch
        %260 = sbr.rel (%p258) target = $region40
      $region39: #{tpu_custom_call.1} parent=5 // pred_region
        // Predicated region
        $region41: #{tpu_custom_call.1} parent=39 // pred_check
          %p261 = pneg %p40
        $region42: #{tpu_custom_call.1} parent=39 // pred_check_branch
          %263 = sbr.rel (%p261) target = $region44
        $region43: #{tpu_custom_call.1} parent=39 // pred_region
          %s264 = sand.u32 %s30, 1
          %s265 = scalar_lea.sflag [#allocation3], %s264
          %s266 = sand.u32 %s30, 1
          %s267 = smul.addr %s266, 512
          %s268 = scalar_lea.vmem [#allocation2], %s267
          %s269 = smul.u32 32, %s20
          %271 = vsyncadd %s265, 0
          %s272 = smul.addr %s269, 2
          %s273 = smul.addr %s272, 8
          %s274 = scalar_lea.hbm %s0, %s273
          %s275 = sshll.u32 %s274, 4
          %s276 = int_to_ptr.hbm [resolvable:$true] %s275
          %s277 = sshll.u32 %s268, 4
          %s278 = int_to_ptr.vmem [resolvable:$true] %s277
          %283 = dma.hbm_to_vmem [thread:$0]  %s276, 8192, %s278, %s265, 256, 256, 16
        $region44: #{tpu_custom_call.1} parent=39 // pred_fallthru
          _
        // Predicated region
        $region45: #{tpu_custom_call.1} parent=39 // pred_check
          %p284 = pneg %p66
        $region46: #{tpu_custom_call.1} parent=39 // pred_check_branch
          %286 = sbr.rel (%p284) target = $region48
        $region47: #{tpu_custom_call.1} parent=39 // pred_region
          %s287 = smul.u32 32, %s20
          %p288 = scmp.lt.s32.totalorder %s287, 63
          %s289 = scalar_select %p288, %s287, 63
          %s290 = smul.addr %s289, 8
          %s291 = scalar_lea.vmem %s1, %s290
          %s292 = smul.u32 32, %s20
        $region48: #{tpu_custom_call.1} parent=39 // pred_fallthru
          _
      $region40: #{tpu_custom_call.1} parent=5 // pred_fallthru
        _
      %p293 = scmp.le.s32.totalorder 1, %s20
      %p294 = scmp.lt.s32.totalorder %s20, 3
      %p295 = pnand %p293, %p294
      %p296 = pneg %p295
      // Predicated region
      $region49: #{tpu_custom_call.1} parent=5 // pred_check
        _
      $region50: #{tpu_custom_call.1} parent=5 // pred_check_branch
        %298 = sbr.rel (%p295) target = $region52
      $region51: #{tpu_custom_call.1} parent=5 // pred_region
        %s299 = ssub.s32 %s20, 1
        %s300 = sand.u32 %s33, 1
        %s301 = scalar_lea.sflag [#allocation3], %s300
        %s302 = sand.u32 %s33, 1
        %s303 = smul.addr %s302, 512
        %s304 = scalar_lea.vmem [#allocation2], %s303
        // Predicated region
        $region53: #{tpu_custom_call.1} parent=51 // pred_check
          %p305 = pneg %p46
        $region54: #{tpu_custom_call.1} parent=51 // pred_check_branch
          %307 = sbr.rel (%p305) target = $region56
        $region55: #{tpu_custom_call.1} parent=51 // pred_region
          %309 = dma.done %s301, 8192
        $region56: #{tpu_custom_call.1} parent=51 // pred_fallthru
          _
        %s310 = sand.u32 %s33, 1
        %s311 = scalar_lea.sflag [#allocation3], %s310
        %s312 = sand.u32 %s33, 1
        %s313 = smul.addr %s312, 512
        %s314 = scalar_lea.vmem [#allocation2], %s313
        %p315 = pneg %p46
        %p316 = pneg %p43
        %s317 = smul.u32 32, %s25
        %p318 = scmp.lt.s32.totalorder %s317, 63
        %s319 = scalar_select %p318, %s317, 63
        %s320 = smul.addr %s319, 8
        %s321 = scalar_lea.vmem %s1, %s320
        %p322 = pneg %p72
        %p323 = pneg %p69
        %p324 = pneg %p93
        %p325 = pneg %p90
        %p326 = pneg %p114
        %p327 = pneg %p111
        %p328 = pneg %p135
        %p329 = pneg %p132
        %p330 = pneg %p156
        %p331 = pneg %p153
        %p332 = pneg %p177
        %p333 = pneg %p174
        %p334 = pneg %p198
        %p335 = pneg %p195
        %p336 = pneg %p224
        %p337 = pneg %p221
        %s338 = sand.u32 %s211, 1
        %s339 = scalar_lea.sflag [#allocation4], %s338
        %s340 = sand.u32 %s211, 1
        %s341 = smul.addr %s340, 768
        %s342 = scalar_lea.vmem [#allocation5], %s341
        %s343 = smul.u32 32, %s25
        %s344 = smul.u32 32, %s25
        %p345 = scmp.lt.s32.totalorder %s344, 63
        %s346 = scalar_select %p345, %s344, 63
        %s347 = smul.addr %s346, 8
        %s348 = scalar_lea.vmem %s1, %s347
        %s349 = smul.u32 32, %s25
        %s350 = smul.u32 32, %s25
        %v352 = vld [vmem:[%s304] sm:$0xff]
        %v353 = vld [vmem:[%s304 + $0x8] sm:$0xff]
        %v354 = vld [vmem:[%s304 + $0x10] sm:$0xff]
        %v355 = vld [vmem:[%s304 + $0x18] sm:$0xff]
        %v356 = vld [vmem:[%s304 + $0x20] sm:$0xff]
        %v357 = vld [vmem:[%s304 + $0x28] sm:$0xff]
        %v358 = vld [vmem:[%s304 + $0x30] sm:$0xff]
        %v359 = vld [vmem:[%s304 + $0x38] sm:$0xff]
        %v360 = vld [vmem:[%s304 + $0x40] sm:$0xff]
        %v361 = vld [vmem:[%s304 + $0x48] sm:$0xff]
        %v362 = vld [vmem:[%s304 + $0x50] sm:$0xff]
        %v363 = vld [vmem:[%s304 + $0x58] sm:$0xff]
        %v364 = vld [vmem:[%s304 + $0x60] sm:$0xff]
        %v365 = vld [vmem:[%s304 + $0x68] sm:$0xff]
        %v366 = vld [vmem:[%s304 + $0x70] sm:$0xff]
        %v367 = vld [vmem:[%s304 + $0x78] sm:$0xff]
        %v368 = vld [vmem:[%s304 + $0x80] sm:$0xff]
        %v369 = vld [vmem:[%s304 + $0x88] sm:$0xff]
        %v370 = vld [vmem:[%s304 + $0x90] sm:$0xff]
        %v371 = vld [vmem:[%s304 + $0x98] sm:$0xff]
        %v372 = vld [vmem:[%s304 + $0xa0] sm:$0xff]
        %v373 = vld [vmem:[%s304 + $0xa8] sm:$0xff]
        %v374 = vld [vmem:[%s304 + $0xb0] sm:$0xff]
        %v375 = vld [vmem:[%s304 + $0xb8] sm:$0xff]
        %v376 = vld [vmem:[%s304 + $0xc0] sm:$0xff]
        %v377 = vld [vmem:[%s304 + $0xc8] sm:$0xff]
        %v378 = vld [vmem:[%s304 + $0xd0] sm:$0xff]
        %v379 = vld [vmem:[%s304 + $0xd8] sm:$0xff]
        %v380 = vld [vmem:[%s304 + $0xe0] sm:$0xff]
        %v381 = vld [vmem:[%s304 + $0xe8] sm:$0xff]
        %v382 = vld [vmem:[%s304 + $0xf0] sm:$0xff]
        %v383 = vld [vmem:[%s304 + $0xf8] sm:$0xff]
        %v384 = vld [vmem:[%s304 + $0x100] sm:$0xff]
        %v385 = vld [vmem:[%s304 + $0x108] sm:$0xff]
        %v386 = vld [vmem:[%s304 + $0x110] sm:$0xff]
        %v387 = vld [vmem:[%s304 + $0x118] sm:$0xff]
        %v388 = vld [vmem:[%s304 + $0x120] sm:$0xff]
        %v389 = vld [vmem:[%s304 + $0x128] sm:$0xff]
        %v390 = vld [vmem:[%s304 + $0x130] sm:$0xff]
        %v391 = vld [vmem:[%s304 + $0x138] sm:$0xff]
        %v392 = vld [vmem:[%s304 + $0x140] sm:$0xff]
        %v393 = vld [vmem:[%s304 + $0x148] sm:$0xff]
        %v394 = vld [vmem:[%s304 + $0x150] sm:$0xff]
        %v395 = vld [vmem:[%s304 + $0x158] sm:$0xff]
        %v396 = vld [vmem:[%s304 + $0x160] sm:$0xff]
        %v397 = vld [vmem:[%s304 + $0x168] sm:$0xff]
        %v398 = vld [vmem:[%s304 + $0x170] sm:$0xff]
        %v399 = vld [vmem:[%s304 + $0x178] sm:$0xff]
        %v400 = vld [vmem:[%s304 + $0x180] sm:$0xff]
        %v401 = vld [vmem:[%s304 + $0x188] sm:$0xff]
        %v402 = vld [vmem:[%s304 + $0x190] sm:$0xff]
        %v403 = vld [vmem:[%s304 + $0x198] sm:$0xff]
        %v404 = vld [vmem:[%s304 + $0x1a0] sm:$0xff]
        %v405 = vld [vmem:[%s304 + $0x1a8] sm:$0xff]
        %v406 = vld [vmem:[%s304 + $0x1b0] sm:$0xff]
        %v407 = vld [vmem:[%s304 + $0x1b8] sm:$0xff]
        %v408 = vld [vmem:[%s304 + $0x1c0] sm:$0xff]
        %v409 = vld [vmem:[%s304 + $0x1c8] sm:$0xff]
        %v410 = vld [vmem:[%s304 + $0x1d0] sm:$0xff]
        %v411 = vld [vmem:[%s304 + $0x1d8] sm:$0xff]
        %v412 = vld [vmem:[%s304 + $0x1e0] sm:$0xff]
        %v413 = vld [vmem:[%s304 + $0x1e8] sm:$0xff]
        %v414 = vld [vmem:[%s304 + $0x1f0] sm:$0xff]
        %v415 = vld [vmem:[%s304 + $0x1f8] sm:$0xff]
        %v416 = vpack.c.bf16 %v354, %v352
        %v417 = vpack.c.bf16 %v355, %v353
        %v418 = vpack.c.bf16 %v358, %v356
        %v419 = vpack.c.bf16 %v359, %v357
        %v420 = vpack.c.bf16 %v362, %v360
        %v421 = vpack.c.bf16 %v363, %v361
        %v422 = vpack.c.bf16 %v366, %v364
        %v423 = vpack.c.bf16 %v367, %v365
        %v424 = vpack.c.bf16 %v370, %v368
        %v425 = vpack.c.bf16 %v371, %v369
        %v426 = vpack.c.bf16 %v374, %v372
        %v427 = vpack.c.bf16 %v375, %v373
        %v428 = vpack.c.bf16 %v378, %v376
        %v429 = vpack.c.bf16 %v379, %v377
        %v430 = vpack.c.bf16 %v382, %v380
        %v431 = vpack.c.bf16 %v383, %v381
        %v432 = vpack.c.bf16 %v386, %v384
        %v433 = vpack.c.bf16 %v387, %v385
        %v434 = vpack.c.bf16 %v390, %v388
        %v435 = vpack.c.bf16 %v391, %v389
        %v436 = vpack.c.bf16 %v394, %v392
        %v437 = vpack.c.bf16 %v395, %v393
        %v438 = vpack.c.bf16 %v398, %v396
        %v439 = vpack.c.bf16 %v399, %v397
        %v440 = vpack.c.bf16 %v402, %v400
        %v441 = vpack.c.bf16 %v403, %v401
        %v442 = vpack.c.bf16 %v406, %v404
        %v443 = vpack.c.bf16 %v407, %v405
        %v444 = vpack.c.bf16 %v410, %v408
        %v445 = vpack.c.bf16 %v411, %v409
        %v446 = vpack.c.bf16 %v414, %v412
        %v447 = vpack.c.bf16 %v415, %v413
        %v448 = vld [vmem:[%s2] sm:$0xf]
        %v449 = vld [vmem:[%s2 + $0x4] sm:$0xf]
        %v450 = vld [vmem:[%s2 + $0x8] sm:$0xf]
        %v451 = vld [vmem:[%s2 + $0xc] sm:$0xf]
        %v452 = vld [vmem:[%s2 + $0x10] sm:$0xf]
        %v453 = vld [vmem:[%s2 + $0x14] sm:$0xf]
        %v454 = vld [vmem:[%s2 + $0x18] sm:$0xf]
        %v455 = vld [vmem:[%s2 + $0x1c] sm:$0xf]
        %v456 = vld [vmem:[%s2 + $0x20] sm:$0xf]
        %v457 = vld [vmem:[%s2 + $0x24] sm:$0xf]
        %v458 = vld [vmem:[%s2 + $0x28] sm:$0xf]
        %v459 = vld [vmem:[%s2 + $0x2c] sm:$0xf]
        %v460 = vld [vmem:[%s2 + $0x30] sm:$0xf]
        %v461 = vld [vmem:[%s2 + $0x34] sm:$0xf]
        %v462 = vld [vmem:[%s2 + $0x38] sm:$0xf]
        %v463 = vld [vmem:[%s2 + $0x3c] sm:$0xf]
        %v464 = vld [vmem:[%s2 + $0x40] sm:$0xf]
        %v465 = vld [vmem:[%s2 + $0x44] sm:$0xf]
        %v466 = vld [vmem:[%s2 + $0x48] sm:$0xf]
        %v467 = vld [vmem:[%s2 + $0x4c] sm:$0xf]
        %v468 = vld [vmem:[%s2 + $0x50] sm:$0xf]
        %v469 = vld [vmem:[%s2 + $0x54] sm:$0xf]
        %v470 = vld [vmem:[%s2 + $0x58] sm:$0xf]
        %v471 = vld [vmem:[%s2 + $0x5c] sm:$0xf]
        %v472 = vld [vmem:[%s2 + $0x60] sm:$0xf]
        %v473 = vld [vmem:[%s2 + $0x64] sm:$0xf]
        %v474 = vld [vmem:[%s2 + $0x68] sm:$0xf]
        %v475 = vld [vmem:[%s2 + $0x6c] sm:$0xf]
        %v476 = vld [vmem:[%s2 + $0x70] sm:$0xf]
        %v477 = vld [vmem:[%s2 + $0x74] sm:$0xf]
        %v478 = vld [vmem:[%s2 + $0x78] sm:$0xf]
        %v479 = vld [vmem:[%s2 + $0x7c] sm:$0xf]
        %v480 = vld [vmem:[%s7] sm:$0x1]
        %v482 = vperm.slane %v480, 0
        %v516 = vunpack.c.l.b16 %v448
        %v517 = vunpack.c.l.b16 %v449
        %v518 = vunpack.c.l.b16 %v450
        %v519 = vunpack.c.l.b16 %v451
        %v520 = vunpack.c.l.b16 %v452
        %v521 = vunpack.c.l.b16 %v453
        %v522 = vunpack.c.l.b16 %v454
        %v523 = vunpack.c.l.b16 %v455
        %v524 = vunpack.c.l.b16 %v456
        %v525 = vunpack.c.l.b16 %v457
        %v526 = vunpack.c.l.b16 %v458
        %v527 = vunpack.c.l.b16 %v459
        %v528 = vunpack.c.l.b16 %v460
        %v529 = vunpack.c.l.b16 %v461
        %v530 = vunpack.c.l.b16 %v462
        %v531 = vunpack.c.l.b16 %v463
        %v532 = vunpack.c.l.b16 %v464
        %v533 = vunpack.c.l.b16 %v465
        %v534 = vunpack.c.l.b16 %v466
        %v535 = vunpack.c.l.b16 %v467
        %v536 = vunpack.c.l.b16 %v468
        %v537 = vunpack.c.l.b16 %v469
        %v538 = vunpack.c.l.b16 %v470
        %v539 = vunpack.c.l.b16 %v471
        %v540 = vunpack.c.l.b16 %v472
        %v541 = vunpack.c.l.b16 %v473
        %v542 = vunpack.c.l.b16 %v474
        %v543 = vunpack.c.l.b16 %v475
        %v544 = vunpack.c.l.b16 %v476
        %v545 = vunpack.c.l.b16 %v477
        %v546 = vunpack.c.l.b16 %v478
        %v547 = vunpack.c.l.b16 %v479
        %v548 = vpack.c.b16 %v517, %v516
        %v549 = vpack.c.b16 %v519, %v518
        %v550 = vpack.c.b16 %v521, %v520
        %v551 = vpack.c.b16 %v523, %v522
        %v552 = vpack.c.b16 %v525, %v524
        %v553 = vpack.c.b16 %v527, %v526
        %v554 = vpack.c.b16 %v529, %v528
        %v555 = vpack.c.b16 %v531, %v530
        %v556 = vpack.c.b16 %v533, %v532
        %v557 = vpack.c.b16 %v535, %v534
        %v558 = vpack.c.b16 %v537, %v536
        %v559 = vpack.c.b16 %v539, %v538
        %v560 = vpack.c.b16 %v541, %v540
        %v561 = vpack.c.b16 %v543, %v542
        %v562 = vpack.c.b16 %v545, %v544
        %v563 = vpack.c.b16 %v547, %v546
        %580 = vmatpush.bf16.msra.mxu0 %v555
        %581 = vmatpush.bf16.msra.mxu0 %v554
        %582 = vmatpush.bf16.msra.mxu0 %v553
        %583 = vmatpush.bf16.msra.mxu0 %v552
        %584 = vmatpush.bf16.msra.mxu0 %v551
        %585 = vmatpush.bf16.msra.mxu0 %v550
        %586 = vmatpush.bf16.msra.mxu0 %v549
        %587 = vmatpush.bf16.msra.mxu0 %v548
        %588 = vmatmul.bf16.gmra.mxu0 %v416
        %v589 = vpop.f32.mrf.mxu0
        %v590 = vadd.f32 %v482, %v589
        %v591 = vpop.f32.mrf.mxu0
        %v592 = vadd.f32 %v482, %v591
        %593 = vmatmul.bf16.gmra.mxu0 %v418
        %v594 = vpop.f32.mrf.mxu0
        %v595 = vadd.f32 %v482, %v594
        %v596 = vpop.f32.mrf.mxu0
        %v597 = vadd.f32 %v482, %v596
        %598 = vmatmul.bf16.gmra.mxu0 %v420
        %v599 = vpop.f32.mrf.mxu0
        %v600 = vadd.f32 %v482, %v599
        %v601 = vpop.f32.mrf.mxu0
        %v602 = vadd.f32 %v482, %v601
        %603 = vmatmul.bf16.gmra.mxu0 %v422
        %v604 = vpop.f32.mrf.mxu0
        %v605 = vadd.f32 %v482, %v604
        %v606 = vpop.f32.mrf.mxu0
        %v607 = vadd.f32 %v482, %v606
        %608 = vmatmul.bf16.gmra.mxu0 %v424
        %v609 = vpop.f32.mrf.mxu0
        %v610 = vadd.f32 %v482, %v609
        %v611 = vpop.f32.mrf.mxu0
        %v612 = vadd.f32 %v482, %v611
        %613 = vmatmul.bf16.gmra.mxu0 %v426
        %v614 = vpop.f32.mrf.mxu0
        %v615 = vadd.f32 %v482, %v614
        %v616 = vpop.f32.mrf.mxu0
        %v617 = vadd.f32 %v482, %v616
        %618 = vmatmul.bf16.gmra.mxu0 %v428
        %v619 = vpop.f32.mrf.mxu0
        %v620 = vadd.f32 %v482, %v619
        %v621 = vpop.f32.mrf.mxu0
        %v622 = vadd.f32 %v482, %v621
        %623 = vmatmul.bf16.gmra.mxu0 %v430
        %v624 = vpop.f32.mrf.mxu0
        %v625 = vadd.f32 %v482, %v624
        %v626 = vpop.f32.mrf.mxu0
        %v627 = vadd.f32 %v482, %v626
        %628 = vmatmul.bf16.gmra.mxu0 %v432
        %v629 = vpop.f32.mrf.mxu0
        %v630 = vadd.f32 %v482, %v629
        %v631 = vpop.f32.mrf.mxu0
        %v632 = vadd.f32 %v482, %v631
        %633 = vmatmul.bf16.gmra.mxu0 %v434
        %v634 = vpop.f32.mrf.mxu0
        %v635 = vadd.f32 %v482, %v634
        %v636 = vpop.f32.mrf.mxu0
        %v637 = vadd.f32 %v482, %v636
        %638 = vmatmul.bf16.gmra.mxu0 %v436
        %v639 = vpop.f32.mrf.mxu0
        %v640 = vadd.f32 %v482, %v639
        %v641 = vpop.f32.mrf.mxu0
        %v642 = vadd.f32 %v482, %v641
        %643 = vmatmul.bf16.gmra.mxu0 %v438
        %v644 = vpop.f32.mrf.mxu0
        %v645 = vadd.f32 %v482, %v644
        %v646 = vpop.f32.mrf.mxu0
        %v647 = vadd.f32 %v482, %v646
        %648 = vmatmul.bf16.gmra.mxu0 %v440
        %v649 = vpop.f32.mrf.mxu0
        %v650 = vadd.f32 %v482, %v649
        %v651 = vpop.f32.mrf.mxu0
        %v652 = vadd.f32 %v482, %v651
        %653 = vmatmul.bf16.gmra.mxu0 %v442
        %v654 = vpop.f32.mrf.mxu0
        %v655 = vadd.f32 %v482, %v654
        %v656 = vpop.f32.mrf.mxu0
        %v657 = vadd.f32 %v482, %v656
        %658 = vmatmul.bf16.gmra.mxu0 %v444
        %v659 = vpop.f32.mrf.mxu0
        %v660 = vadd.f32 %v482, %v659
        %v661 = vpop.f32.mrf.mxu0
        %v662 = vadd.f32 %v482, %v661
        %663 = vmatmul.bf16.gmra.mxu0 %v446
        %v664 = vpop.f32.mrf.mxu0
        %v665 = vadd.f32 %v482, %v664
        %v666 = vpop.f32.mrf.mxu0
        %v667 = vadd.f32 %v482, %v666
        %668 = vdwg.mxu0
        %669 = vmatpush.bf16.msra.mxu0 %v563
        %670 = vmatpush.bf16.msra.mxu0 %v562
        %671 = vmatpush.bf16.msra.mxu0 %v561
        %672 = vmatpush.bf16.msra.mxu0 %v560
        %673 = vmatpush.bf16.msra.mxu0 %v559
        %674 = vmatpush.bf16.msra.mxu0 %v558
        %675 = vmatpush.bf16.msra.mxu0 %v557
        %676 = vmatpush.bf16.msra.mxu0 %v556
        %677 = vmatmul.bf16.gmra.mxu0 %v417
        %v678 = vpop.f32.mrf.mxu0
        %v679 = vadd.f32 %v590, %v678
        %v680 = vpop.f32.mrf.mxu0
        %v681 = vadd.f32 %v592, %v680
        %682 = vmatmul.bf16.gmra.mxu0 %v419
        %v683 = vpop.f32.mrf.mxu0
        %v684 = vadd.f32 %v595, %v683
        %v685 = vpop.f32.mrf.mxu0
        %v686 = vadd.f32 %v597, %v685
        %687 = vmatmul.bf16.gmra.mxu0 %v421
        %v688 = vpop.f32.mrf.mxu0
        %v689 = vadd.f32 %v600, %v688
        %v690 = vpop.f32.mrf.mxu0
        %v691 = vadd.f32 %v602, %v690
        %692 = vmatmul.bf16.gmra.mxu0 %v423
        %v693 = vpop.f32.mrf.mxu0
        %v694 = vadd.f32 %v605, %v693
        %v695 = vpop.f32.mrf.mxu0
        %v696 = vadd.f32 %v607, %v695
        %697 = vmatmul.bf16.gmra.mxu0 %v425
        %v698 = vpop.f32.mrf.mxu0
        %v699 = vadd.f32 %v610, %v698
        %v700 = vpop.f32.mrf.mxu0
        %v701 = vadd.f32 %v612, %v700
        %702 = vmatmul.bf16.gmra.mxu0 %v427
        %v703 = vpop.f32.mrf.mxu0
        %v704 = vadd.f32 %v615, %v703
        %v705 = vpop.f32.mrf.mxu0
        %v706 = vadd.f32 %v617, %v705
        %707 = vmatmul.bf16.gmra.mxu0 %v429
        %v708 = vpop.f32.mrf.mxu0
        %v709 = vadd.f32 %v620, %v708
        %v710 = vpop.f32.mrf.mxu0
        %v711 = vadd.f32 %v622, %v710
        %712 = vmatmul.bf16.gmra.mxu0 %v431
        %v713 = vpop.f32.mrf.mxu0
        %v714 = vadd.f32 %v625, %v713
        %v715 = vpop.f32.mrf.mxu0
        %v716 = vadd.f32 %v627, %v715
        %717 = vmatmul.bf16.gmra.mxu0 %v433
        %v718 = vpop.f32.mrf.mxu0
        %v719 = vadd.f32 %v630, %v718
        %v720 = vpop.f32.mrf.mxu0
        %v721 = vadd.f32 %v632, %v720
        %722 = vmatmul.bf16.gmra.mxu0 %v435
        %v723 = vpop.f32.mrf.mxu0
        %v724 = vadd.f32 %v635, %v723
        %v725 = vpop.f32.mrf.mxu0
        %v726 = vadd.f32 %v637, %v725
        %727 = vmatmul.bf16.gmra.mxu0 %v437
        %v728 = vpop.f32.mrf.mxu0
        %v729 = vadd.f32 %v640, %v728
        %v730 = vpop.f32.mrf.mxu0
        %v731 = vadd.f32 %v642, %v730
        %732 = vmatmul.bf16.gmra.mxu0 %v439
        %v733 = vpop.f32.mrf.mxu0
        %v734 = vadd.f32 %v645, %v733
        %v735 = vpop.f32.mrf.mxu0
        %v736 = vadd.f32 %v647, %v735
        %737 = vmatmul.bf16.gmra.mxu0 %v441
        %v738 = vpop.f32.mrf.mxu0
        %v739 = vadd.f32 %v650, %v738
        %v740 = vpop.f32.mrf.mxu0
        %v741 = vadd.f32 %v652, %v740
        %742 = vmatmul.bf16.gmra.mxu0 %v443
        %v743 = vpop.f32.mrf.mxu0
        %v744 = vadd.f32 %v655, %v743
        %v745 = vpop.f32.mrf.mxu0
        %v746 = vadd.f32 %v657, %v745
        %747 = vmatmul.bf16.gmra.mxu0 %v445
        %v748 = vpop.f32.mrf.mxu0
        %v749 = vadd.f32 %v660, %v748
        %v750 = vpop.f32.mrf.mxu0
        %v751 = vadd.f32 %v662, %v750
        %752 = vmatmul.bf16.gmra.mxu0 %v447
        %v753 = vpop.f32.mrf.mxu0
        %v754 = vadd.f32 %v665, %v753
        %v755 = vpop.f32.mrf.mxu0
        %v756 = vadd.f32 %v667, %v755
        %757 = vdwg.mxu0
        %v758 = vmax.f32 %v679, 0.0
        %v759 = vmax.f32 %v681, 0.0
        %v760 = vmax.f32 %v684, 0.0
        %v761 = vmax.f32 %v686, 0.0
        %v762 = vmax.f32 %v689, 0.0
        %v763 = vmax.f32 %v691, 0.0
        %v764 = vmax.f32 %v694, 0.0
        %v765 = vmax.f32 %v696, 0.0
        %v766 = vmax.f32 %v699, 0.0
        %v767 = vmax.f32 %v701, 0.0
        %v768 = vmax.f32 %v704, 0.0
        %v769 = vmax.f32 %v706, 0.0
        %v770 = vmax.f32 %v709, 0.0
        %v771 = vmax.f32 %v711, 0.0
        %v772 = vmax.f32 %v714, 0.0
        %v773 = vmax.f32 %v716, 0.0
        %v774 = vmax.f32 %v719, 0.0
        %v775 = vmax.f32 %v721, 0.0
        %v776 = vmax.f32 %v724, 0.0
        %v777 = vmax.f32 %v726, 0.0
        %v778 = vmax.f32 %v729, 0.0
        %v779 = vmax.f32 %v731, 0.0
        %v780 = vmax.f32 %v734, 0.0
        %v781 = vmax.f32 %v736, 0.0
        %v782 = vmax.f32 %v739, 0.0
        %v783 = vmax.f32 %v741, 0.0
        %v784 = vmax.f32 %v744, 0.0
        %v785 = vmax.f32 %v746, 0.0
        %v786 = vmax.f32 %v749, 0.0
        %v787 = vmax.f32 %v751, 0.0
        %v788 = vmax.f32 %v754, 0.0
        %v789 = vmax.f32 %v756, 0.0
        %v790 = vpack.c.bf16 %v759, %v758
        %v791 = vpack.c.bf16 %v761, %v760
        %v792 = vpack.c.bf16 %v763, %v762
        %v793 = vpack.c.bf16 %v765, %v764
        %v794 = vpack.c.bf16 %v767, %v766
        %v795 = vpack.c.bf16 %v769, %v768
        %v796 = vpack.c.bf16 %v771, %v770
        %v797 = vpack.c.bf16 %v773, %v772
        %v798 = vpack.c.bf16 %v775, %v774
        %v799 = vpack.c.bf16 %v777, %v776
        %v800 = vpack.c.bf16 %v779, %v778
        %v801 = vpack.c.bf16 %v781, %v780
        %v802 = vpack.c.bf16 %v783, %v782
        %v803 = vpack.c.bf16 %v785, %v784
        %v804 = vpack.c.bf16 %v787, %v786
        %v805 = vpack.c.bf16 %v789, %v788
        %v806 = vld [vmem:[%s3] sm:$0xf]
        %v807 = vld [vmem:[%s3 + $0x4] sm:$0xf]
        %v808 = vld [vmem:[%s3 + $0x8] sm:$0xf]
        %v809 = vld [vmem:[%s3 + $0xc] sm:$0xf]
        %v810 = vld [vmem:[%s3 + $0x10] sm:$0xf]
        %v811 = vld [vmem:[%s3 + $0x14] sm:$0xf]
        %v812 = vld [vmem:[%s3 + $0x18] sm:$0xf]
        %v813 = vld [vmem:[%s3 + $0x1c] sm:$0xf]
        %v814 = vld [vmem:[%s3 + $0x20] sm:$0xf]
        %v815 = vld [vmem:[%s3 + $0x24] sm:$0xf]
        %v816 = vld [vmem:[%s3 + $0x28] sm:$0xf]
        %v817 = vld [vmem:[%s3 + $0x2c] sm:$0xf]
        %v818 = vld [vmem:[%s3 + $0x30] sm:$0xf]
        %v819 = vld [vmem:[%s3 + $0x34] sm:$0xf]
        %v820 = vld [vmem:[%s3 + $0x38] sm:$0xf]
        %v821 = vld [vmem:[%s3 + $0x3c] sm:$0xf]
        %v822 = vld [vmem:[%s7 + $0x1] sm:$0x1]
        %v824 = vperm.slane %v822, 0
        %v842 = vunpack.c.l.b16 %v806
        %v843 = vunpack.c.l.b16 %v807
        %v844 = vunpack.c.l.b16 %v808
        %v845 = vunpack.c.l.b16 %v809
        %v846 = vunpack.c.l.b16 %v810
        %v847 = vunpack.c.l.b16 %v811
        %v848 = vunpack.c.l.b16 %v812
        %v849 = vunpack.c.l.b16 %v813
        %v850 = vunpack.c.l.b16 %v814
        %v851 = vunpack.c.l.b16 %v815
        %v852 = vunpack.c.l.b16 %v816
        %v853 = vunpack.c.l.b16 %v817
        %v854 = vunpack.c.l.b16 %v818
        %v855 = vunpack.c.l.b16 %v819
        %v856 = vunpack.c.l.b16 %v820
        %v857 = vunpack.c.l.b16 %v821
        %v858 = vpack.c.b16 %v843, %v842
        %v859 = vpack.c.b16 %v845, %v844
        %v860 = vpack.c.b16 %v847, %v846
        %v861 = vpack.c.b16 %v849, %v848
        %v862 = vpack.c.b16 %v851, %v850
        %v863 = vpack.c.b16 %v853, %v852
        %v864 = vpack.c.b16 %v855, %v854
        %v865 = vpack.c.b16 %v857, %v856
        %874 = vmatpush.bf16.msra.mxu0 %v865
        %875 = vmatpush.bf16.msra.mxu0 %v864
        %876 = vmatpush.bf16.msra.mxu0 %v863
        %877 = vmatpush.bf16.msra.mxu0 %v862
        %878 = vmatpush.bf16.msra.mxu0 %v861
        %879 = vmatpush.bf16.msra.mxu0 %v860
        %880 = vmatpush.bf16.msra.mxu0 %v859
        %881 = vmatpush.bf16.msra.mxu0 %v858
        %882 = vmatmul.bf16.gmra.mxu0 %v790
        %v883 = vpop.f32.mrf.mxu0
        %v884 = vadd.f32 %v824, %v883
        %v885 = vpop.f32.mrf.mxu0
        %v886 = vadd.f32 %v824, %v885
        %887 = vmatmul.bf16.gmra.mxu0 %v791
        %v888 = vpop.f32.mrf.mxu0
        %v889 = vadd.f32 %v824, %v888
        %v890 = vpop.f32.mrf.mxu0
        %v891 = vadd.f32 %v824, %v890
        %892 = vmatmul.bf16.gmra.mxu0 %v792
        %v893 = vpop.f32.mrf.mxu0
        %v894 = vadd.f32 %v824, %v893
        %v895 = vpop.f32.mrf.mxu0
        %v896 = vadd.f32 %v824, %v895
        %897 = vmatmul.bf16.gmra.mxu0 %v793
        %v898 = vpop.f32.mrf.mxu0
        %v899 = vadd.f32 %v824, %v898
        %v900 = vpop.f32.mrf.mxu0
        %v901 = vadd.f32 %v824, %v900
        %902 = vmatmul.bf16.gmra.mxu0 %v794
        %v903 = vpop.f32.mrf.mxu0
        %v904 = vadd.f32 %v824, %v903
        %v905 = vpop.f32.mrf.mxu0
        %v906 = vadd.f32 %v824, %v905
        %907 = vmatmul.bf16.gmra.mxu0 %v795
        %v908 = vpop.f32.mrf.mxu0
        %v909 = vadd.f32 %v824, %v908
        %v910 = vpop.f32.mrf.mxu0
        %v911 = vadd.f32 %v824, %v910
        %912 = vmatmul.bf16.gmra.mxu0 %v796
        %v913 = vpop.f32.mrf.mxu0
        %v914 = vadd.f32 %v824, %v913
        %v915 = vpop.f32.mrf.mxu0
        %v916 = vadd.f32 %v824, %v915
        %917 = vmatmul.bf16.gmra.mxu0 %v797
        %v918 = vpop.f32.mrf.mxu0
        %v919 = vadd.f32 %v824, %v918
        %v920 = vpop.f32.mrf.mxu0
        %v921 = vadd.f32 %v824, %v920
        %922 = vmatmul.bf16.gmra.mxu0 %v798
        %v923 = vpop.f32.mrf.mxu0
        %v924 = vadd.f32 %v824, %v923
        %v925 = vpop.f32.mrf.mxu0
        %v926 = vadd.f32 %v824, %v925
        %927 = vmatmul.bf16.gmra.mxu0 %v799
        %v928 = vpop.f32.mrf.mxu0
        %v929 = vadd.f32 %v824, %v928
        %v930 = vpop.f32.mrf.mxu0
        %v931 = vadd.f32 %v824, %v930
        %932 = vmatmul.bf16.gmra.mxu0 %v800
        %v933 = vpop.f32.mrf.mxu0
        %v934 = vadd.f32 %v824, %v933
        %v935 = vpop.f32.mrf.mxu0
        %v936 = vadd.f32 %v824, %v935
        %937 = vmatmul.bf16.gmra.mxu0 %v801
        %v938 = vpop.f32.mrf.mxu0
        %v939 = vadd.f32 %v824, %v938
        %v940 = vpop.f32.mrf.mxu0
        %v941 = vadd.f32 %v824, %v940
        %942 = vmatmul.bf16.gmra.mxu0 %v802
        %v943 = vpop.f32.mrf.mxu0
        %v944 = vadd.f32 %v824, %v943
        %v945 = vpop.f32.mrf.mxu0
        %v946 = vadd.f32 %v824, %v945
        %947 = vmatmul.bf16.gmra.mxu0 %v803
        %v948 = vpop.f32.mrf.mxu0
        %v949 = vadd.f32 %v824, %v948
        %v950 = vpop.f32.mrf.mxu0
        %v951 = vadd.f32 %v824, %v950
        %952 = vmatmul.bf16.gmra.mxu0 %v804
        %v953 = vpop.f32.mrf.mxu0
        %v954 = vadd.f32 %v824, %v953
        %v955 = vpop.f32.mrf.mxu0
        %v956 = vadd.f32 %v824, %v955
        %957 = vmatmul.bf16.gmra.mxu0 %v805
        %v958 = vpop.f32.mrf.mxu0
        %v959 = vadd.f32 %v824, %v958
        %v960 = vpop.f32.mrf.mxu0
        %v961 = vadd.f32 %v824, %v960
        %962 = vdwg.mxu0
        %vm963 = vcmp.ge.f32.partialorder %v884, 0.0
        %vm964 = vcmp.ge.f32.partialorder %v886, 0.0
        %vm965 = vcmp.ge.f32.partialorder %v889, 0.0
        %vm966 = vcmp.ge.f32.partialorder %v891, 0.0
        %vm967 = vcmp.ge.f32.partialorder %v894, 0.0
        %vm968 = vcmp.ge.f32.partialorder %v896, 0.0
        %vm969 = vcmp.ge.f32.partialorder %v899, 0.0
        %vm970 = vcmp.ge.f32.partialorder %v901, 0.0
        %vm971 = vcmp.ge.f32.partialorder %v904, 0.0
        %vm972 = vcmp.ge.f32.partialorder %v906, 0.0
        %vm973 = vcmp.ge.f32.partialorder %v909, 0.0
        %vm974 = vcmp.ge.f32.partialorder %v911, 0.0
        %vm975 = vcmp.ge.f32.partialorder %v914, 0.0
        %vm976 = vcmp.ge.f32.partialorder %v916, 0.0
        %vm977 = vcmp.ge.f32.partialorder %v919, 0.0
        %vm978 = vcmp.ge.f32.partialorder %v921, 0.0
        %vm979 = vcmp.ge.f32.partialorder %v924, 0.0
        %vm980 = vcmp.ge.f32.partialorder %v926, 0.0
        %vm981 = vcmp.ge.f32.partialorder %v929, 0.0
        %vm982 = vcmp.ge.f32.partialorder %v931, 0.0
        %vm983 = vcmp.ge.f32.partialorder %v934, 0.0
        %vm984 = vcmp.ge.f32.partialorder %v936, 0.0
        %vm985 = vcmp.ge.f32.partialorder %v939, 0.0
        %vm986 = vcmp.ge.f32.partialorder %v941, 0.0
        %vm987 = vcmp.ge.f32.partialorder %v944, 0.0
        %vm988 = vcmp.ge.f32.partialorder %v946, 0.0
        %vm989 = vcmp.ge.f32.partialorder %v949, 0.0
        %vm990 = vcmp.ge.f32.partialorder %v951, 0.0
        %vm991 = vcmp.ge.f32.partialorder %v954, 0.0
        %vm992 = vcmp.ge.f32.partialorder %v956, 0.0
        %vm993 = vcmp.ge.f32.partialorder %v959, 0.0
        %vm994 = vcmp.ge.f32.partialorder %v961, 0.0
        %v995 = vmul.f32 %v884, 0.01
        %v996 = vmul.f32 %v886, 0.01
        %v997 = vmul.f32 %v889, 0.01
        %v998 = vmul.f32 %v891, 0.01
        %v999 = vmul.f32 %v894, 0.01
        %v1000 = vmul.f32 %v896, 0.01
        %v1001 = vmul.f32 %v899, 0.01
        %v1002 = vmul.f32 %v901, 0.01
        %v1003 = vmul.f32 %v904, 0.01
        %v1004 = vmul.f32 %v906, 0.01
        %v1005 = vmul.f32 %v909, 0.01
        %v1006 = vmul.f32 %v911, 0.01
        %v1007 = vmul.f32 %v914, 0.01
        %v1008 = vmul.f32 %v916, 0.01
        %v1009 = vmul.f32 %v919, 0.01
        %v1010 = vmul.f32 %v921, 0.01
        %v1011 = vmul.f32 %v924, 0.01
        %v1012 = vmul.f32 %v926, 0.01
        %v1013 = vmul.f32 %v929, 0.01
        %v1014 = vmul.f32 %v931, 0.01
        %v1015 = vmul.f32 %v934, 0.01
        %v1016 = vmul.f32 %v936, 0.01
        %v1017 = vmul.f32 %v939, 0.01
        %v1018 = vmul.f32 %v941, 0.01
        %v1019 = vmul.f32 %v944, 0.01
        %v1020 = vmul.f32 %v946, 0.01
        %v1021 = vmul.f32 %v949, 0.01
        %v1022 = vmul.f32 %v951, 0.01
        %v1023 = vmul.f32 %v954, 0.01
        %v1024 = vmul.f32 %v956, 0.01
        %v1025 = vmul.f32 %v959, 0.01
        %v1026 = vmul.f32 %v961, 0.01
        %v1027 = vsel %vm963, %v884, %v995
        %v1028 = vsel %vm964, %v886, %v996
        %v1029 = vsel %vm965, %v889, %v997
        %v1030 = vsel %vm966, %v891, %v998
        %v1031 = vsel %vm967, %v894, %v999
        %v1032 = vsel %vm968, %v896, %v1000
        %v1033 = vsel %vm969, %v899, %v1001
        %v1034 = vsel %vm970, %v901, %v1002
        %v1035 = vsel %vm971, %v904, %v1003
        %v1036 = vsel %vm972, %v906, %v1004
        %v1037 = vsel %vm973, %v909, %v1005
        %v1038 = vsel %vm974, %v911, %v1006
        %v1039 = vsel %vm975, %v914, %v1007
        %v1040 = vsel %vm976, %v916, %v1008
        %v1041 = vsel %vm977, %v919, %v1009
        %v1042 = vsel %vm978, %v921, %v1010
        %v1043 = vsel %vm979, %v924, %v1011
        %v1044 = vsel %vm980, %v926, %v1012
        %v1045 = vsel %vm981, %v929, %v1013
        %v1046 = vsel %vm982, %v931, %v1014
        %v1047 = vsel %vm983, %v934, %v1015
        %v1048 = vsel %vm984, %v936, %v1016
        %v1049 = vsel %vm985, %v939, %v1017
        %v1050 = vsel %vm986, %v941, %v1018
        %v1051 = vsel %vm987, %v944, %v1019
        %v1052 = vsel %vm988, %v946, %v1020
        %v1053 = vsel %vm989, %v949, %v1021
        %v1054 = vsel %vm990, %v951, %v1022
        %v1055 = vsel %vm991, %v954, %v1023
        %v1056 = vsel %vm992, %v956, %v1024
        %v1057 = vsel %vm993, %v959, %v1025
        %v1058 = vsel %vm994, %v961, %v1026
        %v1059 = vpack.c.bf16 %v1028, %v1027
        %v1060 = vpack.c.bf16 %v1030, %v1029
        %v1061 = vpack.c.bf16 %v1032, %v1031
        %v1062 = vpack.c.bf16 %v1034, %v1033
        %v1063 = vpack.c.bf16 %v1036, %v1035
        %v1064 = vpack.c.bf16 %v1038, %v1037
        %v1065 = vpack.c.bf16 %v1040, %v1039
        %v1066 = vpack.c.bf16 %v1042, %v1041
        %v1067 = vpack.c.bf16 %v1044, %v1043
        %v1068 = vpack.c.bf16 %v1046, %v1045
        %v1069 = vpack.c.bf16 %v1048, %v1047
        %v1070 = vpack.c.bf16 %v1050, %v1049
        %v1071 = vpack.c.bf16 %v1052, %v1051
        %v1072 = vpack.c.bf16 %v1054, %v1053
        %v1073 = vpack.c.bf16 %v1056, %v1055
        %v1074 = vpack.c.bf16 %v1058, %v1057
        %v1075 = vld [vmem:[%s4] sm:$0xf]
        %v1076 = vld [vmem:[%s4 + $0x4] sm:$0xf]
        %v1077 = vld [vmem:[%s4 + $0x8] sm:$0xf]
        %v1078 = vld [vmem:[%s4 + $0xc] sm:$0xf]
        %v1079 = vld [vmem:[%s4 + $0x10] sm:$0xf]
        %v1080 = vld [vmem:[%s4 + $0x14] sm:$0xf]
        %v1081 = vld [vmem:[%s4 + $0x18] sm:$0xf]
        %v1082 = vld [vmem:[%s4 + $0x1c] sm:$0xf]
        %v1083 = vld [vmem:[%s7 + $0x2] sm:$0x1]
        %v1085 = vperm.slane %v1083, 0
        %v1095 = vunpack.c.l.b16 %v1075
        %v1096 = vunpack.c.l.b16 %v1076
        %v1097 = vunpack.c.l.b16 %v1077
        %v1098 = vunpack.c.l.b16 %v1078
        %v1099 = vunpack.c.l.b16 %v1079
        %v1100 = vunpack.c.l.b16 %v1080
        %v1101 = vunpack.c.l.b16 %v1081
        %v1102 = vunpack.c.l.b16 %v1082
        %v1103 = vpack.c.b16 %v1096, %v1095
        %v1104 = vpack.c.b16 %v1098, %v1097
        %v1105 = vpack.c.b16 %v1100, %v1099
        %v1106 = vpack.c.b16 %v1102, %v1101
        %vm1111 = vcmask 523264
        %v1113 = vsel %vm1111, %v1059, 0
        %v1116 = vsel %vm1111, %v1060, 0
        %v1119 = vsel %vm1111, %v1061, 0
        %v1122 = vsel %vm1111, %v1062, 0
        %v1125 = vsel %vm1111, %v1063, 0
        %v1128 = vsel %vm1111, %v1064, 0
        %v1131 = vsel %vm1111, %v1065, 0
        %v1134 = vsel %vm1111, %v1066, 0
        %v1137 = vsel %vm1111, %v1067, 0
        %v1140 = vsel %vm1111, %v1068, 0
        %v1143 = vsel %vm1111, %v1069, 0
        %v1146 = vsel %vm1111, %v1070, 0
        %v1149 = vsel %vm1111, %v1071, 0
        %v1152 = vsel %vm1111, %v1072, 0
        %v1155 = vsel %vm1111, %v1073, 0
        %v1158 = vsel %vm1111, %v1074, 0
        %1160 = vmatpush.bf16.msra.mxu0 0
        %1161 = vmatpush.bf16.msra.mxu0 0
        %1162 = vmatpush.bf16.msra.mxu0 0
        %1163 = vmatpush.bf16.msra.mxu0 0
        %1164 = vmatpush.bf16.msra.mxu0 %v1106
        %1165 = vmatpush.bf16.msra.mxu0 %v1105
        %1166 = vmatpush.bf16.msra.mxu0 %v1104
        %1167 = vmatpush.bf16.msra.mxu0 %v1103
        %1168 = vmatmul.bf16.gmra.mxu0 %v1113
        %v1169 = vpop.f32.mrf.mxu0
        %v1170 = vadd.f32 %v1085, %v1169
        %v1171 = vpop.f32.mrf.mxu0
        %v1172 = vadd.f32 %v1085, %v1171
        %1173 = vmatmul.bf16.gmra.mxu0 %v1116
        %v1174 = vpop.f32.mrf.mxu0
        %v1175 = vadd.f32 %v1085, %v1174
        %v1176 = vpop.f32.mrf.mxu0
        %v1177 = vadd.f32 %v1085, %v1176
        %1178 = vmatmul.bf16.gmra.mxu0 %v1119
        %v1179 = vpop.f32.mrf.mxu0
        %v1180 = vadd.f32 %v1085, %v1179
        %v1181 = vpop.f32.mrf.mxu0
        %v1182 = vadd.f32 %v1085, %v1181
        %1183 = vmatmul.bf16.gmra.mxu0 %v1122
        %v1184 = vpop.f32.mrf.mxu0
        %v1185 = vadd.f32 %v1085, %v1184
        %v1186 = vpop.f32.mrf.mxu0
        %v1187 = vadd.f32 %v1085, %v1186
        %1188 = vmatmul.bf16.gmra.mxu0 %v1125
        %v1189 = vpop.f32.mrf.mxu0
        %v1190 = vadd.f32 %v1085, %v1189
        %v1191 = vpop.f32.mrf.mxu0
        %v1192 = vadd.f32 %v1085, %v1191
        %1193 = vmatmul.bf16.gmra.mxu0 %v1128
        %v1194 = vpop.f32.mrf.mxu0
        %v1195 = vadd.f32 %v1085, %v1194
        %v1196 = vpop.f32.mrf.mxu0
        %v1197 = vadd.f32 %v1085, %v1196
        %1198 = vmatmul.bf16.gmra.mxu0 %v1131
        %v1199 = vpop.f32.mrf.mxu0
        %v1200 = vadd.f32 %v1085, %v1199
        %v1201 = vpop.f32.mrf.mxu0
        %v1202 = vadd.f32 %v1085, %v1201
        %1203 = vmatmul.bf16.gmra.mxu0 %v1134
        %v1204 = vpop.f32.mrf.mxu0
        %v1205 = vadd.f32 %v1085, %v1204
        %v1206 = vpop.f32.mrf.mxu0
        %v1207 = vadd.f32 %v1085, %v1206
        %1208 = vmatmul.bf16.gmra.mxu0 %v1137
        %v1209 = vpop.f32.mrf.mxu0
        %v1210 = vadd.f32 %v1085, %v1209
        %v1211 = vpop.f32.mrf.mxu0
        %v1212 = vadd.f32 %v1085, %v1211
        %1213 = vmatmul.bf16.gmra.mxu0 %v1140
        %v1214 = vpop.f32.mrf.mxu0
        %v1215 = vadd.f32 %v1085, %v1214
        %v1216 = vpop.f32.mrf.mxu0
        %v1217 = vadd.f32 %v1085, %v1216
        %1218 = vmatmul.bf16.gmra.mxu0 %v1143
        %v1219 = vpop.f32.mrf.mxu0
        %v1220 = vadd.f32 %v1085, %v1219
        %v1221 = vpop.f32.mrf.mxu0
        %v1222 = vadd.f32 %v1085, %v1221
        %1223 = vmatmul.bf16.gmra.mxu0 %v1146
        %v1224 = vpop.f32.mrf.mxu0
        %v1225 = vadd.f32 %v1085, %v1224
        %v1226 = vpop.f32.mrf.mxu0
        %v1227 = vadd.f32 %v1085, %v1226
        %1228 = vmatmul.bf16.gmra.mxu0 %v1149
        %v1229 = vpop.f32.mrf.mxu0
        %v1230 = vadd.f32 %v1085, %v1229
        %v1231 = vpop.f32.mrf.mxu0
        %v1232 = vadd.f32 %v1085, %v1231
        %1233 = vmatmul.bf16.gmra.mxu0 %v1152
        %v1234 = vpop.f32.mrf.mxu0
        %v1235 = vadd.f32 %v1085, %v1234
        %v1236 = vpop.f32.mrf.mxu0
        %v1237 = vadd.f32 %v1085, %v1236
        %1238 = vmatmul.bf16.gmra.mxu0 %v1155
        %v1239 = vpop.f32.mrf.mxu0
        %v1240 = vadd.f32 %v1085, %v1239
        %v1241 = vpop.f32.mrf.mxu0
        %v1242 = vadd.f32 %v1085, %v1241
        %1243 = vmatmul.bf16.gmra.mxu0 %v1158
        %v1244 = vpop.f32.mrf.mxu0
        %v1245 = vadd.f32 %v1085, %v1244
        %v1246 = vpop.f32.mrf.mxu0
        %v1247 = vadd.f32 %v1085, %v1246
        %1248 = vdwg.mxu0
        %1249 = vst [vmem:[%s342] sm:$0xff] %v1170
        %1250 = vst [vmem:[%s342 + $0x18] sm:$0xff] %v1172
        %1251 = vst [vmem:[%s342 + $0x30] sm:$0xff] %v1175
        %1252 = vst [vmem:[%s342 + $0x48] sm:$0xff] %v1177
        %1253 = vst [vmem:[%s342 + $0x60] sm:$0xff] %v1180
        %1254 = vst [vmem:[%s342 + $0x78] sm:$0xff] %v1182
        %1255 = vst [vmem:[%s342 + $0x90] sm:$0xff] %v1185
        %1256 = vst [vmem:[%s342 + $0xa8] sm:$0xff] %v1187
        %1257 = vst [vmem:[%s342 + $0xc0] sm:$0xff] %v1190
        %1258 = vst [vmem:[%s342 + $0xd8] sm:$0xff] %v1192
        %1259 = vst [vmem:[%s342 + $0xf0] sm:$0xff] %v1195
        %1260 = vst [vmem:[%s342 + $0x108] sm:$0xff] %v1197
        %1261 = vst [vmem:[%s342 + $0x120] sm:$0xff] %v1200
        %1262 = vst [vmem:[%s342 + $0x138] sm:$0xff] %v1202
        %1263 = vst [vmem:[%s342 + $0x150] sm:$0xff] %v1205
        %1264 = vst [vmem:[%s342 + $0x168] sm:$0xff] %v1207
        %1265 = vst [vmem:[%s342 + $0x180] sm:$0xff] %v1210
        %1266 = vst [vmem:[%s342 + $0x198] sm:$0xff] %v1212
        %1267 = vst [vmem:[%s342 + $0x1b0] sm:$0xff] %v1215
        %1268 = vst [vmem:[%s342 + $0x1c8] sm:$0xff] %v1217
        %1269 = vst [vmem:[%s342 + $0x1e0] sm:$0xff] %v1220
        %1270 = vst [vmem:[%s342 + $0x1f8] sm:$0xff] %v1222
        %1271 = vst [vmem:[%s342 + $0x210] sm:$0xff] %v1225
        %1272 = vst [vmem:[%s342 + $0x228] sm:$0xff] %v1227
        %1273 = vst [vmem:[%s342 + $0x240] sm:$0xff] %v1230
        %1274 = vst [vmem:[%s342 + $0x258] sm:$0xff] %v1232
        %1275 = vst [vmem:[%s342 + $0x270] sm:$0xff] %v1235
        %1276 = vst [vmem:[%s342 + $0x288] sm:$0xff] %v1237
        %1277 = vst [vmem:[%s342 + $0x2a0] sm:$0xff] %v1240
        %1278 = vst [vmem:[%s342 + $0x2b8] sm:$0xff] %v1242
        %1279 = vst [vmem:[%s342 + $0x2d0] sm:$0xff] %v1245
        %1280 = vst [vmem:[%s342 + $0x2e8] sm:$0xff] %v1247
        %v1281 = vmul.f32 %v1170, 0.5
        %v1282 = vmul.f32 %v1172, 0.5
        %v1283 = vmul.f32 %v1175, 0.5
        %v1284 = vmul.f32 %v1177, 0.5
        %v1285 = vmul.f32 %v1180, 0.5
        %v1286 = vmul.f32 %v1182, 0.5
        %v1287 = vmul.f32 %v1185, 0.5
        %v1288 = vmul.f32 %v1187, 0.5
        %v1289 = vmul.f32 %v1190, 0.5
        %v1290 = vmul.f32 %v1192, 0.5
        %v1291 = vmul.f32 %v1195, 0.5
        %v1292 = vmul.f32 %v1197, 0.5
        %v1293 = vmul.f32 %v1200, 0.5
        %v1294 = vmul.f32 %v1202, 0.5
        %v1295 = vmul.f32 %v1205, 0.5
        %v1296 = vmul.f32 %v1207, 0.5
        %v1297 = vmul.f32 %v1210, 0.5
        %v1298 = vmul.f32 %v1212, 0.5
        %v1299 = vmul.f32 %v1215, 0.5
        %v1300 = vmul.f32 %v1217, 0.5
        %v1301 = vmul.f32 %v1220, 0.5
        %v1302 = vmul.f32 %v1222, 0.5
        %v1303 = vmul.f32 %v1225, 0.5
        %v1304 = vmul.f32 %v1227, 0.5
        %v1305 = vmul.f32 %v1230, 0.5
        %v1306 = vmul.f32 %v1232, 0.5
        %v1307 = vmul.f32 %v1235, 0.5
        %v1308 = vmul.f32 %v1237, 0.5
        %v1309 = vmul.f32 %v1240, 0.5
        %v1310 = vmul.f32 %v1242, 0.5
        %v1311 = vmul.f32 %v1245, 0.5
        %v1312 = vmul.f32 %v1247, 0.5
        %v1313 = vmul.f32 %v1281, 1.442695
        %v1314 = vpow.pop %v1313
        %v1315 = vmul.f32 %v1282, 1.442695
        %v1316 = vpow.pop %v1315
        %v1317 = vmul.f32 %v1283, 1.442695
        %v1318 = vpow.pop %v1317
        %v1319 = vmul.f32 %v1284, 1.442695
        %v1320 = vpow.pop %v1319
        %v1321 = vmul.f32 %v1285, 1.442695
        %v1322 = vpow.pop %v1321
        %v1323 = vmul.f32 %v1286, 1.442695
        %v1324 = vpow.pop %v1323
        %v1325 = vmul.f32 %v1287, 1.442695
        %v1326 = vpow.pop %v1325
        %v1327 = vmul.f32 %v1288, 1.442695
        %v1328 = vpow.pop %v1327
        %v1329 = vmul.f32 %v1289, 1.442695
        %v1330 = vpow.pop %v1329
        %v1331 = vmul.f32 %v1290, 1.442695
        %v1332 = vpow.pop %v1331
        %v1333 = vmul.f32 %v1291, 1.442695
        %v1334 = vpow.pop %v1333
        %v1335 = vmul.f32 %v1292, 1.442695
        %v1336 = vpow.pop %v1335
        %v1337 = vmul.f32 %v1293, 1.442695
        %v1338 = vpow.pop %v1337
        %v1339 = vmul.f32 %v1294, 1.442695
        %v1340 = vpow.pop %v1339
        %v1341 = vmul.f32 %v1295, 1.442695
        %v1342 = vpow.pop %v1341
        %v1343 = vmul.f32 %v1296, 1.442695
        %v1344 = vpow.pop %v1343
        %v1345 = vmul.f32 %v1297, 1.442695
        %v1346 = vpow.pop %v1345
        %v1347 = vmul.f32 %v1298, 1.442695
        %v1348 = vpow.pop %v1347
        %v1349 = vmul.f32 %v1299, 1.442695
        %v1350 = vpow.pop %v1349
        %v1351 = vmul.f32 %v1300, 1.442695
        %v1352 = vpow.pop %v1351
        %v1353 = vmul.f32 %v1301, 1.442695
        %v1354 = vpow.pop %v1353
        %v1355 = vmul.f32 %v1302, 1.442695
        %v1356 = vpow.pop %v1355
        %v1357 = vmul.f32 %v1303, 1.442695
        %v1358 = vpow.pop %v1357
        %v1359 = vmul.f32 %v1304, 1.442695
        %v1360 = vpow.pop %v1359
        %v1361 = vmul.f32 %v1305, 1.442695
        %v1362 = vpow.pop %v1361
        %v1363 = vmul.f32 %v1306, 1.442695
        %v1364 = vpow.pop %v1363
        %v1365 = vmul.f32 %v1307, 1.442695
        %v1366 = vpow.pop %v1365
        %v1367 = vmul.f32 %v1308, 1.442695
        %v1368 = vpow.pop %v1367
        %v1369 = vmul.f32 %v1309, 1.442695
        %v1370 = vpow.pop %v1369
        %v1371 = vmul.f32 %v1310, 1.442695
        %v1372 = vpow.pop %v1371
        %v1373 = vmul.f32 %v1311, 1.442695
        %v1374 = vpow.pop %v1373
        %v1375 = vmul.f32 %v1312, 1.442695
        %v1376 = vpow.pop %v1375
        %v1377 = vld [vmem:[%s348] sm:$0xff]
        %v1378 = vld [vmem:[%s348 + $0x8] sm:$0xff]
        %v1379 = vld [vmem:[%s348 + $0x10] sm:$0xff]
        %v1380 = vld [vmem:[%s348 + $0x18] sm:$0xff]
        %v1381 = vld [vmem:[%s348 + $0x20] sm:$0xff]
        %v1382 = vld [vmem:[%s348 + $0x28] sm:$0xff]
        %v1383 = vld [vmem:[%s348 + $0x30] sm:$0xff]
        %v1384 = vld [vmem:[%s348 + $0x38] sm:$0xff]
        %v1385 = vld [vmem:[%s348 + $0x40] sm:$0xff]
        %v1386 = vld [vmem:[%s348 + $0x48] sm:$0xff]
        %v1387 = vld [vmem:[%s348 + $0x50] sm:$0xff]
        %v1388 = vld [vmem:[%s348 + $0x58] sm:$0xff]
        %v1389 = vld [vmem:[%s348 + $0x60] sm:$0xff]
        %v1390 = vld [vmem:[%s348 + $0x68] sm:$0xff]
        %v1391 = vld [vmem:[%s348 + $0x70] sm:$0xff]
        %v1392 = vld [vmem:[%s348 + $0x78] sm:$0xff]
        %v1393 = vld [vmem:[%s348 + $0x80] sm:$0xff]
        %v1394 = vld [vmem:[%s348 + $0x88] sm:$0xff]
        %v1395 = vld [vmem:[%s348 + $0x90] sm:$0xff]
        %v1396 = vld [vmem:[%s348 + $0x98] sm:$0xff]
        %v1397 = vld [vmem:[%s348 + $0xa0] sm:$0xff]
        %v1398 = vld [vmem:[%s348 + $0xa8] sm:$0xff]
        %v1399 = vld [vmem:[%s348 + $0xb0] sm:$0xff]
        %v1400 = vld [vmem:[%s348 + $0xb8] sm:$0xff]
        %v1401 = vld [vmem:[%s348 + $0xc0] sm:$0xff]
        %v1402 = vld [vmem:[%s348 + $0xc8] sm:$0xff]
        %v1403 = vld [vmem:[%s348 + $0xd0] sm:$0xff]
        %v1404 = vld [vmem:[%s348 + $0xd8] sm:$0xff]
        %v1405 = vld [vmem:[%s348 + $0xe0] sm:$0xff]
        %v1406 = vld [vmem:[%s348 + $0xe8] sm:$0xff]
        %v1407 = vld [vmem:[%s348 + $0xf0] sm:$0xff]
        %v1408 = vld [vmem:[%s348 + $0xf8] sm:$0xff]
        %1441 = vrot.lane.b32.xlu0 %v1377, 64
        %v1442 = vpop.permute.xlu0 %1441
        %1443 = vrot.lane.b32.xlu0 %v1378, 64
        %v1444 = vpop.permute.xlu0 %1443
        %1445 = vrot.lane.b32.xlu0 %v1379, 64
        %v1446 = vpop.permute.xlu0 %1445
        %1447 = vrot.lane.b32.xlu0 %v1380, 64
        %v1448 = vpop.permute.xlu0 %1447
        %1449 = vrot.lane.b32.xlu0 %v1381, 64
        %v1450 = vpop.permute.xlu0 %1449
        %1451 = vrot.lane.b32.xlu0 %v1382, 64
        %v1452 = vpop.permute.xlu0 %1451
        %1453 = vrot.lane.b32.xlu0 %v1383, 64
        %v1454 = vpop.permute.xlu0 %1453
        %1455 = vrot.lane.b32.xlu0 %v1384, 64
        %v1456 = vpop.permute.xlu0 %1455
        %1457 = vrot.lane.b32.xlu0 %v1385, 64
        %v1458 = vpop.permute.xlu0 %1457
        %1459 = vrot.lane.b32.xlu0 %v1386, 64
        %v1460 = vpop.permute.xlu0 %1459
        %1461 = vrot.lane.b32.xlu0 %v1387, 64
        %v1462 = vpop.permute.xlu0 %1461
        %1463 = vrot.lane.b32.xlu0 %v1388, 64
        %v1464 = vpop.permute.xlu0 %1463
        %1465 = vrot.lane.b32.xlu0 %v1389, 64
        %v1466 = vpop.permute.xlu0 %1465
        %1467 = vrot.lane.b32.xlu0 %v1390, 64
        %v1468 = vpop.permute.xlu0 %1467
        %1469 = vrot.lane.b32.xlu0 %v1391, 64
        %v1470 = vpop.permute.xlu0 %1469
        %1471 = vrot.lane.b32.xlu0 %v1392, 64
        %v1472 = vpop.permute.xlu0 %1471
        %1473 = vrot.lane.b32.xlu0 %v1393, 64
        %v1474 = vpop.permute.xlu0 %1473
        %1475 = vrot.lane.b32.xlu0 %v1394, 64
        %v1476 = vpop.permute.xlu0 %1475
        %1477 = vrot.lane.b32.xlu0 %v1395, 64
        %v1478 = vpop.permute.xlu0 %1477
        %1479 = vrot.lane.b32.xlu0 %v1396, 64
        %v1480 = vpop.permute.xlu0 %1479
        %1481 = vrot.lane.b32.xlu0 %v1397, 64
        %v1482 = vpop.permute.xlu0 %1481
        %1483 = vrot.lane.b32.xlu0 %v1398, 64
        %v1484 = vpop.permute.xlu0 %1483
        %1485 = vrot.lane.b32.xlu0 %v1399, 64
        %v1486 = vpop.permute.xlu0 %1485
        %1487 = vrot.lane.b32.xlu0 %v1400, 64
        %v1488 = vpop.permute.xlu0 %1487
        %1489 = vrot.lane.b32.xlu0 %v1401, 64
        %v1490 = vpop.permute.xlu0 %1489
        %1491 = vrot.lane.b32.xlu0 %v1402, 64
        %v1492 = vpop.permute.xlu0 %1491
        %1493 = vrot.lane.b32.xlu0 %v1403, 64
        %v1494 = vpop.permute.xlu0 %1493
        %1495 = vrot.lane.b32.xlu0 %v1404, 64
        %v1496 = vpop.permute.xlu0 %1495
        %1497 = vrot.lane.b32.xlu0 %v1405, 64
        %v1498 = vpop.permute.xlu0 %1497
        %1499 = vrot.lane.b32.xlu0 %v1406, 64
        %v1500 = vpop.permute.xlu0 %1499
        %1501 = vrot.lane.b32.xlu0 %v1407, 64
        %v1502 = vpop.permute.xlu0 %1501
        %1503 = vrot.lane.b32.xlu0 %v1408, 64
        %v1504 = vpop.permute.xlu0 %1503
        %v1537 = vmul.f32 %v1314, %v1442
        %v1538 = vmul.f32 %v1316, %v1444
        %v1539 = vmul.f32 %v1318, %v1446
        %v1540 = vmul.f32 %v1320, %v1448
        %v1541 = vmul.f32 %v1322, %v1450
        %v1542 = vmul.f32 %v1324, %v1452
        %v1543 = vmul.f32 %v1326, %v1454
        %v1544 = vmul.f32 %v1328, %v1456
        %v1545 = vmul.f32 %v1330, %v1458
        %v1546 = vmul.f32 %v1332, %v1460
        %v1547 = vmul.f32 %v1334, %v1462
        %v1548 = vmul.f32 %v1336, %v1464
        %v1549 = vmul.f32 %v1338, %v1466
        %v1550 = vmul.f32 %v1340, %v1468
        %v1551 = vmul.f32 %v1342, %v1470
        %v1552 = vmul.f32 %v1344, %v1472
        %v1553 = vmul.f32 %v1346, %v1474
        %v1554 = vmul.f32 %v1348, %v1476
        %v1555 = vmul.f32 %v1350, %v1478
        %v1556 = vmul.f32 %v1352, %v1480
        %v1557 = vmul.f32 %v1354, %v1482
        %v1558 = vmul.f32 %v1356, %v1484
        %v1559 = vmul.f32 %v1358, %v1486
        %v1560 = vmul.f32 %v1360, %v1488
        %v1561 = vmul.f32 %v1362, %v1490
        %v1562 = vmul.f32 %v1364, %v1492
        %v1563 = vmul.f32 %v1366, %v1494
        %v1564 = vmul.f32 %v1368, %v1496
        %v1565 = vmul.f32 %v1370, %v1498
        %v1566 = vmul.f32 %v1372, %v1500
        %v1567 = vmul.f32 %v1374, %v1502
        %v1568 = vmul.f32 %v1376, %v1504
        %1601 = vrot.lane.b32.xlu0 %v1537, 64
        %v1602 = vpop.permute.xlu0 %1601
        %1603 = vrot.lane.b32.xlu0 %v1538, 64
        %v1604 = vpop.permute.xlu0 %1603
        %1605 = vrot.lane.b32.xlu0 %v1539, 64
        %v1606 = vpop.permute.xlu0 %1605
        %1607 = vrot.lane.b32.xlu0 %v1540, 64
        %v1608 = vpop.permute.xlu0 %1607
        %1609 = vrot.lane.b32.xlu0 %v1541, 64
        %v1610 = vpop.permute.xlu0 %1609
        %1611 = vrot.lane.b32.xlu0 %v1542, 64
        %v1612 = vpop.permute.xlu0 %1611
        %1613 = vrot.lane.b32.xlu0 %v1543, 64
        %v1614 = vpop.permute.xlu0 %1613
        %1615 = vrot.lane.b32.xlu0 %v1544, 64
        %v1616 = vpop.permute.xlu0 %1615
        %1617 = vrot.lane.b32.xlu0 %v1545, 64
        %v1618 = vpop.permute.xlu0 %1617
        %1619 = vrot.lane.b32.xlu0 %v1546, 64
        %v1620 = vpop.permute.xlu0 %1619
        %1621 = vrot.lane.b32.xlu0 %v1547, 64
        %v1622 = vpop.permute.xlu0 %1621
        %1623 = vrot.lane.b32.xlu0 %v1548, 64
        %v1624 = vpop.permute.xlu0 %1623
        %1625 = vrot.lane.b32.xlu0 %v1549, 64
        %v1626 = vpop.permute.xlu0 %1625
        %1627 = vrot.lane.b32.xlu0 %v1550, 64
        %v1628 = vpop.permute.xlu0 %1627
        %1629 = vrot.lane.b32.xlu0 %v1551, 64
        %v1630 = vpop.permute.xlu0 %1629
        %1631 = vrot.lane.b32.xlu0 %v1552, 64
        %v1632 = vpop.permute.xlu0 %1631
        %1633 = vrot.lane.b32.xlu0 %v1553, 64
        %v1634 = vpop.permute.xlu0 %1633
        %1635 = vrot.lane.b32.xlu0 %v1554, 64
        %v1636 = vpop.permute.xlu0 %1635
        %1637 = vrot.lane.b32.xlu0 %v1555, 64
        %v1638 = vpop.permute.xlu0 %1637
        %1639 = vrot.lane.b32.xlu0 %v1556, 64
        %v1640 = vpop.permute.xlu0 %1639
        %1641 = vrot.lane.b32.xlu0 %v1557, 64
        %v1642 = vpop.permute.xlu0 %1641
        %1643 = vrot.lane.b32.xlu0 %v1558, 64
        %v1644 = vpop.permute.xlu0 %1643
        %1645 = vrot.lane.b32.xlu0 %v1559, 64
        %v1646 = vpop.permute.xlu0 %1645
        %1647 = vrot.lane.b32.xlu0 %v1560, 64
        %v1648 = vpop.permute.xlu0 %1647
        %1649 = vrot.lane.b32.xlu0 %v1561, 64
        %v1650 = vpop.permute.xlu0 %1649
        %1651 = vrot.lane.b32.xlu0 %v1562, 64
        %v1652 = vpop.permute.xlu0 %1651
        %1653 = vrot.lane.b32.xlu0 %v1563, 64
        %v1654 = vpop.permute.xlu0 %1653
        %1655 = vrot.lane.b32.xlu0 %v1564, 64
        %v1656 = vpop.permute.xlu0 %1655
        %1657 = vrot.lane.b32.xlu0 %v1565, 64
        %v1658 = vpop.permute.xlu0 %1657
        %1659 = vrot.lane.b32.xlu0 %v1566, 64
        %v1660 = vpop.permute.xlu0 %1659
        %1661 = vrot.lane.b32.xlu0 %v1567, 64
        %v1662 = vpop.permute.xlu0 %1661
        %1663 = vrot.lane.b32.xlu0 %v1568, 64
        %v1664 = vpop.permute.xlu0 %1663
        %v1697 = vadd.f32 %v1170, %v1602
        %v1698 = vadd.f32 %v1172, %v1604
        %v1699 = vadd.f32 %v1175, %v1606
        %v1700 = vadd.f32 %v1177, %v1608
        %v1701 = vadd.f32 %v1180, %v1610
        %v1702 = vadd.f32 %v1182, %v1612
        %v1703 = vadd.f32 %v1185, %v1614
        %v1704 = vadd.f32 %v1187, %v1616
        %v1705 = vadd.f32 %v1190, %v1618
        %v1706 = vadd.f32 %v1192, %v1620
        %v1707 = vadd.f32 %v1195, %v1622
        %v1708 = vadd.f32 %v1197, %v1624
        %v1709 = vadd.f32 %v1200, %v1626
        %v1710 = vadd.f32 %v1202, %v1628
        %v1711 = vadd.f32 %v1205, %v1630
        %v1712 = vadd.f32 %v1207, %v1632
        %v1713 = vadd.f32 %v1210, %v1634
        %v1714 = vadd.f32 %v1212, %v1636
        %v1715 = vadd.f32 %v1215, %v1638
        %v1716 = vadd.f32 %v1217, %v1640
        %v1717 = vadd.f32 %v1220, %v1642
        %v1718 = vadd.f32 %v1222, %v1644
        %v1719 = vadd.f32 %v1225, %v1646
        %v1720 = vadd.f32 %v1227, %v1648
        %v1721 = vadd.f32 %v1230, %v1650
        %v1722 = vadd.f32 %v1232, %v1652
        %v1723 = vadd.f32 %v1235, %v1654
        %v1724 = vadd.f32 %v1237, %v1656
        %v1725 = vadd.f32 %v1240, %v1658
        %v1726 = vadd.f32 %v1242, %v1660
        %v1727 = vadd.f32 %v1245, %v1662
        %v1728 = vadd.f32 %v1247, %v1664
        %v1729 = vpack.c.bf16 %v1698, %v1697
        %v1730 = vpack.c.bf16 %v1700, %v1699
        %v1731 = vpack.c.bf16 %v1702, %v1701
        %v1732 = vpack.c.bf16 %v1704, %v1703
        %v1733 = vpack.c.bf16 %v1706, %v1705
        %v1734 = vpack.c.bf16 %v1708, %v1707
        %v1735 = vpack.c.bf16 %v1710, %v1709
        %v1736 = vpack.c.bf16 %v1712, %v1711
        %v1737 = vpack.c.bf16 %v1714, %v1713
        %v1738 = vpack.c.bf16 %v1716, %v1715
        %v1739 = vpack.c.bf16 %v1718, %v1717
        %v1740 = vpack.c.bf16 %v1720, %v1719
        %v1741 = vpack.c.bf16 %v1722, %v1721
        %v1742 = vpack.c.bf16 %v1724, %v1723
        %v1743 = vpack.c.bf16 %v1726, %v1725
        %v1744 = vpack.c.bf16 %v1728, %v1727
        %v1745 = vld [vmem:[%s5] sm:$0xf]
        %v1746 = vld [vmem:[%s5 + $0x4] sm:$0xf]
        %v1747 = vld [vmem:[%s5 + $0x8] sm:$0xf]
        %v1748 = vld [vmem:[%s5 + $0xc] sm:$0xf]
        %v1749 = vld [vmem:[%s5 + $0x10] sm:$0xf]
        %v1750 = vld [vmem:[%s5 + $0x14] sm:$0xf]
        %v1751 = vld [vmem:[%s5 + $0x18] sm:$0xf]
        %v1752 = vld [vmem:[%s5 + $0x1c] sm:$0xf]
        %v1753 = vld [vmem:[%s7 + $0x3] sm:$0x1]
        %v1755 = vperm.slane %v1753, 0
        %v1765 = vunpack.c.l.b16 %v1745
        %v1766 = vunpack.c.l.b16 %v1746
        %v1767 = vunpack.c.l.b16 %v1747
        %v1768 = vunpack.c.l.b16 %v1748
        %v1769 = vunpack.c.l.b16 %v1749
        %v1770 = vunpack.c.l.b16 %v1750
        %v1771 = vunpack.c.l.b16 %v1751
        %v1772 = vunpack.c.l.b16 %v1752
        %v1773 = vpack.c.b16 %v1766, %v1765
        %v1774 = vpack.c.b16 %v1768, %v1767
        %v1775 = vpack.c.b16 %v1770, %v1769
        %v1776 = vpack.c.b16 %v1772, %v1771
        %v1782 = vsel %vm1111, %v1729, 0
        %v1785 = vsel %vm1111, %v1730, 0
        %v1788 = vsel %vm1111, %v1731, 0
        %v1791 = vsel %vm1111, %v1732, 0
        %v1794 = vsel %vm1111, %v1733, 0
        %v1797 = vsel %vm1111, %v1734, 0
        %v1800 = vsel %vm1111, %v1735, 0
        %v1803 = vsel %vm1111, %v1736, 0
        %v1806 = vsel %vm1111, %v1737, 0
        %v1809 = vsel %vm1111, %v1738, 0
        %v1812 = vsel %vm1111, %v1739, 0
        %v1815 = vsel %vm1111, %v1740, 0
        %v1818 = vsel %vm1111, %v1741, 0
        %v1821 = vsel %vm1111, %v1742, 0
        %v1824 = vsel %vm1111, %v1743, 0
        %v1827 = vsel %vm1111, %v1744, 0
        %1829 = vmatpush.bf16.msra.mxu0 0
        %1830 = vmatpush.bf16.msra.mxu0 0
        %1831 = vmatpush.bf16.msra.mxu0 0
        %1832 = vmatpush.bf16.msra.mxu0 0
        %1833 = vmatpush.bf16.msra.mxu0 %v1776
        %1834 = vmatpush.bf16.msra.mxu0 %v1775
        %1835 = vmatpush.bf16.msra.mxu0 %v1774
        %1836 = vmatpush.bf16.msra.mxu0 %v1773
        %1837 = vmatmul.bf16.gmra.mxu0 %v1782
        %v1838 = vpop.f32.mrf.mxu0
        %v1839 = vadd.f32 %v1755, %v1838
        %v1840 = vpop.f32.mrf.mxu0
        %v1841 = vadd.f32 %v1755, %v1840
        %1842 = vmatmul.bf16.gmra.mxu0 %v1785
        %v1843 = vpop.f32.mrf.mxu0
        %v1844 = vadd.f32 %v1755, %v1843
        %v1845 = vpop.f32.mrf.mxu0
        %v1846 = vadd.f32 %v1755, %v1845
        %1847 = vmatmul.bf16.gmra.mxu0 %v1788
        %v1848 = vpop.f32.mrf.mxu0
        %v1849 = vadd.f32 %v1755, %v1848
        %v1850 = vpop.f32.mrf.mxu0
        %v1851 = vadd.f32 %v1755, %v1850
        %1852 = vmatmul.bf16.gmra.mxu0 %v1791
        %v1853 = vpop.f32.mrf.mxu0
        %v1854 = vadd.f32 %v1755, %v1853
        %v1855 = vpop.f32.mrf.mxu0
        %v1856 = vadd.f32 %v1755, %v1855
        %1857 = vmatmul.bf16.gmra.mxu0 %v1794
        %v1858 = vpop.f32.mrf.mxu0
        %v1859 = vadd.f32 %v1755, %v1858
        %v1860 = vpop.f32.mrf.mxu0
        %v1861 = vadd.f32 %v1755, %v1860
        %1862 = vmatmul.bf16.gmra.mxu0 %v1797
        %v1863 = vpop.f32.mrf.mxu0
        %v1864 = vadd.f32 %v1755, %v1863
        %v1865 = vpop.f32.mrf.mxu0
        %v1866 = vadd.f32 %v1755, %v1865
        %1867 = vmatmul.bf16.gmra.mxu0 %v1800
        %v1868 = vpop.f32.mrf.mxu0
        %v1869 = vadd.f32 %v1755, %v1868
        %v1870 = vpop.f32.mrf.mxu0
        %v1871 = vadd.f32 %v1755, %v1870
        %1872 = vmatmul.bf16.gmra.mxu0 %v1803
        %v1873 = vpop.f32.mrf.mxu0
        %v1874 = vadd.f32 %v1755, %v1873
        %v1875 = vpop.f32.mrf.mxu0
        %v1876 = vadd.f32 %v1755, %v1875
        %1877 = vmatmul.bf16.gmra.mxu0 %v1806
        %v1878 = vpop.f32.mrf.mxu0
        %v1879 = vadd.f32 %v1755, %v1878
        %v1880 = vpop.f32.mrf.mxu0
        %v1881 = vadd.f32 %v1755, %v1880
        %1882 = vmatmul.bf16.gmra.mxu0 %v1809
        %v1883 = vpop.f32.mrf.mxu0
        %v1884 = vadd.f32 %v1755, %v1883
        %v1885 = vpop.f32.mrf.mxu0
        %v1886 = vadd.f32 %v1755, %v1885
        %1887 = vmatmul.bf16.gmra.mxu0 %v1812
        %v1888 = vpop.f32.mrf.mxu0
        %v1889 = vadd.f32 %v1755, %v1888
        %v1890 = vpop.f32.mrf.mxu0
        %v1891 = vadd.f32 %v1755, %v1890
        %1892 = vmatmul.bf16.gmra.mxu0 %v1815
        %v1893 = vpop.f32.mrf.mxu0
        %v1894 = vadd.f32 %v1755, %v1893
        %v1895 = vpop.f32.mrf.mxu0
        %v1896 = vadd.f32 %v1755, %v1895
        %1897 = vmatmul.bf16.gmra.mxu0 %v1818
        %v1898 = vpop.f32.mrf.mxu0
        %v1899 = vadd.f32 %v1755, %v1898
        %v1900 = vpop.f32.mrf.mxu0
        %v1901 = vadd.f32 %v1755, %v1900
        %1902 = vmatmul.bf16.gmra.mxu0 %v1821
        %v1903 = vpop.f32.mrf.mxu0
        %v1904 = vadd.f32 %v1755, %v1903
        %v1905 = vpop.f32.mrf.mxu0
        %v1906 = vadd.f32 %v1755, %v1905
        %1907 = vmatmul.bf16.gmra.mxu0 %v1824
        %v1908 = vpop.f32.mrf.mxu0
        %v1909 = vadd.f32 %v1755, %v1908
        %v1910 = vpop.f32.mrf.mxu0
        %v1911 = vadd.f32 %v1755, %v1910
        %1912 = vmatmul.bf16.gmra.mxu0 %v1827
        %v1913 = vpop.f32.mrf.mxu0
        %v1914 = vadd.f32 %v1755, %v1913
        %v1915 = vpop.f32.mrf.mxu0
        %v1916 = vadd.f32 %v1755, %v1915
        %1917 = vdwg.mxu0
        %v1918 = vmax.f32 %v1839, 0.0
        %v1919 = vmax.f32 %v1841, 0.0
        %v1920 = vmax.f32 %v1844, 0.0
        %v1921 = vmax.f32 %v1846, 0.0
        %v1922 = vmax.f32 %v1849, 0.0
        %v1923 = vmax.f32 %v1851, 0.0
        %v1924 = vmax.f32 %v1854, 0.0
        %v1925 = vmax.f32 %v1856, 0.0
        %v1926 = vmax.f32 %v1859, 0.0
        %v1927 = vmax.f32 %v1861, 0.0
        %v1928 = vmax.f32 %v1864, 0.0
        %v1929 = vmax.f32 %v1866, 0.0
        %v1930 = vmax.f32 %v1869, 0.0
        %v1931 = vmax.f32 %v1871, 0.0
        %v1932 = vmax.f32 %v1874, 0.0
        %v1933 = vmax.f32 %v1876, 0.0
        %v1934 = vmax.f32 %v1879, 0.0
        %v1935 = vmax.f32 %v1881, 0.0
        %v1936 = vmax.f32 %v1884, 0.0
        %v1937 = vmax.f32 %v1886, 0.0
        %v1938 = vmax.f32 %v1889, 0.0
        %v1939 = vmax.f32 %v1891, 0.0
        %v1940 = vmax.f32 %v1894, 0.0
        %v1941 = vmax.f32 %v1896, 0.0
        %v1942 = vmax.f32 %v1899, 0.0
        %v1943 = vmax.f32 %v1901, 0.0
        %v1944 = vmax.f32 %v1904, 0.0
        %v1945 = vmax.f32 %v1906, 0.0
        %v1946 = vmax.f32 %v1909, 0.0
        %v1947 = vmax.f32 %v1911, 0.0
        %v1948 = vmax.f32 %v1914, 0.0
        %v1949 = vmax.f32 %v1916, 0.0
        %v1950 = vpack.c.bf16 %v1919, %v1918
        %v1951 = vpack.c.bf16 %v1921, %v1920
        %v1952 = vpack.c.bf16 %v1923, %v1922
        %v1953 = vpack.c.bf16 %v1925, %v1924
        %v1954 = vpack.c.bf16 %v1927, %v1926
        %v1955 = vpack.c.bf16 %v1929, %v1928
        %v1956 = vpack.c.bf16 %v1931, %v1930
        %v1957 = vpack.c.bf16 %v1933, %v1932
        %v1958 = vpack.c.bf16 %v1935, %v1934
        %v1959 = vpack.c.bf16 %v1937, %v1936
        %v1960 = vpack.c.bf16 %v1939, %v1938
        %v1961 = vpack.c.bf16 %v1941, %v1940
        %v1962 = vpack.c.bf16 %v1943, %v1942
        %v1963 = vpack.c.bf16 %v1945, %v1944
        %v1964 = vpack.c.bf16 %v1947, %v1946
        %v1965 = vpack.c.bf16 %v1949, %v1948
        %v1966 = vld [vmem:[%s6] sm:$0xff]
        %v1967 = vld [vmem:[%s6 + $0x8] sm:$0xff]
        %v1968 = vld [vmem:[%s6 + $0x10] sm:$0xff]
        %v1969 = vld [vmem:[%s6 + $0x18] sm:$0xff]
        %v1970 = vld [vmem:[%s6 + $0x20] sm:$0xff]
        %v1971 = vld [vmem:[%s6 + $0x28] sm:$0xff]
        %v1972 = vld [vmem:[%s6 + $0x30] sm:$0xff]
        %v1973 = vld [vmem:[%s6 + $0x38] sm:$0xff]
        %v1974 = vld [vmem:[%s6 + $0x40] sm:$0xff]
        %v1975 = vld [vmem:[%s6 + $0x48] sm:$0xff]
        %v1976 = vld [vmem:[%s6 + $0x50] sm:$0xff]
        %v1977 = vld [vmem:[%s6 + $0x58] sm:$0xff]
        %v1978 = vld [vmem:[%s6 + $0x60] sm:$0xff]
        %v1979 = vld [vmem:[%s6 + $0x68] sm:$0xff]
        %v1980 = vld [vmem:[%s6 + $0x70] sm:$0xff]
        %v1981 = vld [vmem:[%s6 + $0x78] sm:$0xff]
        %v1982 = vld [vmem:[%s7 + $0x4] sm:$0x3]
        %v1984 = vperm.slane %v1982, 0
        %v1985 = vperm.slane %v1982, 1
        %v2004 = vunpack.c.l.b16 %v1966
        %v2005 = vunpack.c.h.b16 %v1966
        %v2006 = vunpack.c.l.b16 %v1967
        %v2007 = vunpack.c.h.b16 %v1967
        %v2008 = vunpack.c.l.b16 %v1968
        %v2009 = vunpack.c.h.b16 %v1968
        %v2010 = vunpack.c.l.b16 %v1969
        %v2011 = vunpack.c.h.b16 %v1969
        %v2012 = vunpack.c.l.b16 %v1970
        %v2013 = vunpack.c.h.b16 %v1970
        %v2014 = vunpack.c.l.b16 %v1971
        %v2015 = vunpack.c.h.b16 %v1971
        %v2016 = vunpack.c.l.b16 %v1972
        %v2017 = vunpack.c.h.b16 %v1972
        %v2018 = vunpack.c.l.b16 %v1973
        %v2019 = vunpack.c.h.b16 %v1973
        %v2020 = vunpack.c.l.b16 %v1974
        %v2021 = vunpack.c.h.b16 %v1974
        %v2022 = vunpack.c.l.b16 %v1975
        %v2023 = vunpack.c.h.b16 %v1975
        %v2024 = vunpack.c.l.b16 %v1976
        %v2025 = vunpack.c.h.b16 %v1976
        %v2026 = vunpack.c.l.b16 %v1977
        %v2027 = vunpack.c.h.b16 %v1977
        %v2028 = vunpack.c.l.b16 %v1978
        %v2029 = vunpack.c.h.b16 %v1978
        %v2030 = vunpack.c.l.b16 %v1979
        %v2031 = vunpack.c.h.b16 %v1979
        %v2032 = vunpack.c.l.b16 %v1980
        %v2033 = vunpack.c.h.b16 %v1980
        %v2034 = vunpack.c.l.b16 %v1981
        %v2035 = vunpack.c.h.b16 %v1981
        %v2036 = vpack.c.b16 %v2006, %v2004
        %v2037 = vpack.c.b16 %v2007, %v2005
        %v2038 = vpack.c.b16 %v2010, %v2008
        %v2039 = vpack.c.b16 %v2011, %v2009
        %v2040 = vpack.c.b16 %v2014, %v2012
        %v2041 = vpack.c.b16 %v2015, %v2013
        %v2042 = vpack.c.b16 %v2018, %v2016
        %v2043 = vpack.c.b16 %v2019, %v2017
        %v2044 = vpack.c.b16 %v2022, %v2020
        %v2045 = vpack.c.b16 %v2023, %v2021
        %v2046 = vpack.c.b16 %v2026, %v2024
        %v2047 = vpack.c.b16 %v2027, %v2025
        %v2048 = vpack.c.b16 %v2030, %v2028
        %v2049 = vpack.c.b16 %v2031, %v2029
        %v2050 = vpack.c.b16 %v2034, %v2032
        %v2051 = vpack.c.b16 %v2035, %v2033
        %2068 = vmatpush.bf16.msra.mxu0 %v2050
        %2069 = vmatpush.bf16.msra.mxu0 %v2048
        %2070 = vmatpush.bf16.msra.mxu0 %v2046
        %2071 = vmatpush.bf16.msra.mxu0 %v2044
        %2072 = vmatpush.bf16.msra.mxu0 %v2042
        %2073 = vmatpush.bf16.msra.mxu0 %v2040
        %2074 = vmatpush.bf16.msra.mxu0 %v2038
        %2075 = vmatpush.bf16.msra.mxu0 %v2036
        %2076 = vmatmul.bf16.gmra.mxu0 %v1950
        %v2077 = vpop.f32.mrf.mxu0
        %v2078 = vadd.f32 %v1984, %v2077
        %v2079 = vpop.f32.mrf.mxu0
        %v2080 = vadd.f32 %v1984, %v2079
        %2081 = vmatmul.bf16.gmra.mxu0 %v1951
        %v2082 = vpop.f32.mrf.mxu0
        %v2083 = vadd.f32 %v1984, %v2082
        %v2084 = vpop.f32.mrf.mxu0
        %v2085 = vadd.f32 %v1984, %v2084
        %2086 = vmatmul.bf16.gmra.mxu0 %v1952
        %v2087 = vpop.f32.mrf.mxu0
        %v2088 = vadd.f32 %v1984, %v2087
        %v2089 = vpop.f32.mrf.mxu0
        %v2090 = vadd.f32 %v1984, %v2089
        %2091 = vmatmul.bf16.gmra.mxu0 %v1953
        %v2092 = vpop.f32.mrf.mxu0
        %v2093 = vadd.f32 %v1984, %v2092
        %v2094 = vpop.f32.mrf.mxu0
        %v2095 = vadd.f32 %v1984, %v2094
        %2096 = vmatmul.bf16.gmra.mxu0 %v1954
        %v2097 = vpop.f32.mrf.mxu0
        %v2098 = vadd.f32 %v1984, %v2097
        %v2099 = vpop.f32.mrf.mxu0
        %v2100 = vadd.f32 %v1984, %v2099
        %2101 = vmatmul.bf16.gmra.mxu0 %v1955
        %v2102 = vpop.f32.mrf.mxu0
        %v2103 = vadd.f32 %v1984, %v2102
        %v2104 = vpop.f32.mrf.mxu0
        %v2105 = vadd.f32 %v1984, %v2104
        %2106 = vmatmul.bf16.gmra.mxu0 %v1956
        %v2107 = vpop.f32.mrf.mxu0
        %v2108 = vadd.f32 %v1984, %v2107
        %v2109 = vpop.f32.mrf.mxu0
        %v2110 = vadd.f32 %v1984, %v2109
        %2111 = vmatmul.bf16.gmra.mxu0 %v1957
        %v2112 = vpop.f32.mrf.mxu0
        %v2113 = vadd.f32 %v1984, %v2112
        %v2114 = vpop.f32.mrf.mxu0
        %v2115 = vadd.f32 %v1984, %v2114
        %2116 = vmatmul.bf16.gmra.mxu0 %v1958
        %v2117 = vpop.f32.mrf.mxu0
        %v2118 = vadd.f32 %v1984, %v2117
        %v2119 = vpop.f32.mrf.mxu0
        %v2120 = vadd.f32 %v1984, %v2119
        %2121 = vmatmul.bf16.gmra.mxu0 %v1959
        %v2122 = vpop.f32.mrf.mxu0
        %v2123 = vadd.f32 %v1984, %v2122
        %v2124 = vpop.f32.mrf.mxu0
        %v2125 = vadd.f32 %v1984, %v2124
        %2126 = vmatmul.bf16.gmra.mxu0 %v1960
        %v2127 = vpop.f32.mrf.mxu0
        %v2128 = vadd.f32 %v1984, %v2127
        %v2129 = vpop.f32.mrf.mxu0
        %v2130 = vadd.f32 %v1984, %v2129
        %2131 = vmatmul.bf16.gmra.mxu0 %v1961
        %v2132 = vpop.f32.mrf.mxu0
        %v2133 = vadd.f32 %v1984, %v2132
        %v2134 = vpop.f32.mrf.mxu0
        %v2135 = vadd.f32 %v1984, %v2134
        %2136 = vmatmul.bf16.gmra.mxu0 %v1962
        %v2137 = vpop.f32.mrf.mxu0
        %v2138 = vadd.f32 %v1984, %v2137
        %v2139 = vpop.f32.mrf.mxu0
        %v2140 = vadd.f32 %v1984, %v2139
        %2141 = vmatmul.bf16.gmra.mxu0 %v1963
        %v2142 = vpop.f32.mrf.mxu0
        %v2143 = vadd.f32 %v1984, %v2142
        %v2144 = vpop.f32.mrf.mxu0
        %v2145 = vadd.f32 %v1984, %v2144
        %2146 = vmatmul.bf16.gmra.mxu0 %v1964
        %v2147 = vpop.f32.mrf.mxu0
        %v2148 = vadd.f32 %v1984, %v2147
        %v2149 = vpop.f32.mrf.mxu0
        %v2150 = vadd.f32 %v1984, %v2149
        %2151 = vmatmul.bf16.gmra.mxu0 %v1965
        %v2152 = vpop.f32.mrf.mxu0
        %v2153 = vadd.f32 %v1984, %v2152
        %v2154 = vpop.f32.mrf.mxu0
        %v2155 = vadd.f32 %v1984, %v2154
        %2156 = vdwg.mxu0
        %2157 = vmatpush.bf16.msra.mxu0 %v2051
        %2158 = vmatpush.bf16.msra.mxu0 %v2049
        %2159 = vmatpush.bf16.msra.mxu0 %v2047
        %2160 = vmatpush.bf16.msra.mxu0 %v2045
        %2161 = vmatpush.bf16.msra.mxu0 %v2043
        %2162 = vmatpush.bf16.msra.mxu0 %v2041
        %2163 = vmatpush.bf16.msra.mxu0 %v2039
        %2164 = vmatpush.bf16.msra.mxu0 %v2037
        %2165 = vmatmul.bf16.gmra.mxu0 %v1950
        %v2166 = vpop.f32.mrf.mxu0
        %v2167 = vadd.f32 %v1985, %v2166
        %v2168 = vpop.f32.mrf.mxu0
        %v2169 = vadd.f32 %v1985, %v2168
        %2170 = vmatmul.bf16.gmra.mxu0 %v1951
        %v2171 = vpop.f32.mrf.mxu0
        %v2172 = vadd.f32 %v1985, %v2171
        %v2173 = vpop.f32.mrf.mxu0
        %v2174 = vadd.f32 %v1985, %v2173
        %2175 = vmatmul.bf16.gmra.mxu0 %v1952
        %v2176 = vpop.f32.mrf.mxu0
        %v2177 = vadd.f32 %v1985, %v2176
        %v2178 = vpop.f32.mrf.mxu0
        %v2179 = vadd.f32 %v1985, %v2178
        %2180 = vmatmul.bf16.gmra.mxu0 %v1953
        %v2181 = vpop.f32.mrf.mxu0
        %v2182 = vadd.f32 %v1985, %v2181
        %v2183 = vpop.f32.mrf.mxu0
        %v2184 = vadd.f32 %v1985, %v2183
        %2185 = vmatmul.bf16.gmra.mxu0 %v1954
        %v2186 = vpop.f32.mrf.mxu0
        %v2187 = vadd.f32 %v1985, %v2186
        %v2188 = vpop.f32.mrf.mxu0
        %v2189 = vadd.f32 %v1985, %v2188
        %2190 = vmatmul.bf16.gmra.mxu0 %v1955
        %v2191 = vpop.f32.mrf.mxu0
        %v2192 = vadd.f32 %v1985, %v2191
        %v2193 = vpop.f32.mrf.mxu0
        %v2194 = vadd.f32 %v1985, %v2193
        %2195 = vmatmul.bf16.gmra.mxu0 %v1956
        %v2196 = vpop.f32.mrf.mxu0
        %v2197 = vadd.f32 %v1985, %v2196
        %v2198 = vpop.f32.mrf.mxu0
        %v2199 = vadd.f32 %v1985, %v2198
        %2200 = vmatmul.bf16.gmra.mxu0 %v1957
        %v2201 = vpop.f32.mrf.mxu0
        %v2202 = vadd.f32 %v1985, %v2201
        %v2203 = vpop.f32.mrf.mxu0
        %v2204 = vadd.f32 %v1985, %v2203
        %2205 = vmatmul.bf16.gmra.mxu0 %v1958
        %v2206 = vpop.f32.mrf.mxu0
        %v2207 = vadd.f32 %v1985, %v2206
        %v2208 = vpop.f32.mrf.mxu0
        %v2209 = vadd.f32 %v1985, %v2208
        %2210 = vmatmul.bf16.gmra.mxu0 %v1959
        %v2211 = vpop.f32.mrf.mxu0
        %v2212 = vadd.f32 %v1985, %v2211
        %v2213 = vpop.f32.mrf.mxu0
        %v2214 = vadd.f32 %v1985, %v2213
        %2215 = vmatmul.bf16.gmra.mxu0 %v1960
        %v2216 = vpop.f32.mrf.mxu0
        %v2217 = vadd.f32 %v1985, %v2216
        %v2218 = vpop.f32.mrf.mxu0
        %v2219 = vadd.f32 %v1985, %v2218
        %2220 = vmatmul.bf16.gmra.mxu0 %v1961
        %v2221 = vpop.f32.mrf.mxu0
        %v2222 = vadd.f32 %v1985, %v2221
        %v2223 = vpop.f32.mrf.mxu0
        %v2224 = vadd.f32 %v1985, %v2223
        %2225 = vmatmul.bf16.gmra.mxu0 %v1962
        %v2226 = vpop.f32.mrf.mxu0
        %v2227 = vadd.f32 %v1985, %v2226
        %v2228 = vpop.f32.mrf.mxu0
        %v2229 = vadd.f32 %v1985, %v2228
        %2230 = vmatmul.bf16.gmra.mxu0 %v1963
        %v2231 = vpop.f32.mrf.mxu0
        %v2232 = vadd.f32 %v1985, %v2231
        %v2233 = vpop.f32.mrf.mxu0
        %v2234 = vadd.f32 %v1985, %v2233
        %2235 = vmatmul.bf16.gmra.mxu0 %v1964
        %v2236 = vpop.f32.mrf.mxu0
        %v2237 = vadd.f32 %v1985, %v2236
        %v2238 = vpop.f32.mrf.mxu0
        %v2239 = vadd.f32 %v1985, %v2238
        %2240 = vmatmul.bf16.gmra.mxu0 %v1965
        %v2241 = vpop.f32.mrf.mxu0
        %v2242 = vadd.f32 %v1985, %v2241
        %v2243 = vpop.f32.mrf.mxu0
        %v2244 = vadd.f32 %v1985, %v2243
        %2245 = vdwg.mxu0
        %2246 = vst [vmem:[%s342 + $0x8] sm:$0xff] %v2078
        %2247 = vst [vmem:[%s342 + $0x10] sm:$0xff] %v2167
        %2248 = vst [vmem:[%s342 + $0x20] sm:$0xff] %v2080
        %2249 = vst [vmem:[%s342 + $0x28] sm:$0xff] %v2169
        %2250 = vst [vmem:[%s342 + $0x38] sm:$0xff] %v2083
        %2251 = vst [vmem:[%s342 + $0x40] sm:$0xff] %v2172
        %2252 = vst [vmem:[%s342 + $0x50] sm:$0xff] %v2085
        %2253 = vst [vmem:[%s342 + $0x58] sm:$0xff] %v2174
        %2254 = vst [vmem:[%s342 + $0x68] sm:$0xff] %v2088
        %2255 = vst [vmem:[%s342 + $0x70] sm:$0xff] %v2177
        %2256 = vst [vmem:[%s342 + $0x80] sm:$0xff] %v2090
        %2257 = vst [vmem:[%s342 + $0x88] sm:$0xff] %v2179
        %2258 = vst [vmem:[%s342 + $0x98] sm:$0xff] %v2093
        %2259 = vst [vmem:[%s342 + $0xa0] sm:$0xff] %v2182
        %2260 = vst [vmem:[%s342 + $0xb0] sm:$0xff] %v2095
        %2261 = vst [vmem:[%s342 + $0xb8] sm:$0xff] %v2184
        %2262 = vst [vmem:[%s342 + $0xc8] sm:$0xff] %v2098
        %2263 = vst [vmem:[%s342 + $0xd0] sm:$0xff] %v2187
        %2264 = vst [vmem:[%s342 + $0xe0] sm:$0xff] %v2100
        %2265 = vst [vmem:[%s342 + $0xe8] sm:$0xff] %v2189
        %2266 = vst [vmem:[%s342 + $0xf8] sm:$0xff] %v2103
        %2267 = vst [vmem:[%s342 + $0x100] sm:$0xff] %v2192
        %2268 = vst [vmem:[%s342 + $0x110] sm:$0xff] %v2105
        %2269 = vst [vmem:[%s342 + $0x118] sm:$0xff] %v2194
        %2270 = vst [vmem:[%s342 + $0x128] sm:$0xff] %v2108
        %2271 = vst [vmem:[%s342 + $0x130] sm:$0xff] %v2197
        %2272 = vst [vmem:[%s342 + $0x140] sm:$0xff] %v2110
        %2273 = vst [vmem:[%s342 + $0x148] sm:$0xff] %v2199
        %2274 = vst [vmem:[%s342 + $0x158] sm:$0xff] %v2113
        %2275 = vst [vmem:[%s342 + $0x160] sm:$0xff] %v2202
        %2276 = vst [vmem:[%s342 + $0x170] sm:$0xff] %v2115
        %2277 = vst [vmem:[%s342 + $0x178] sm:$0xff] %v2204
        %2278 = vst [vmem:[%s342 + $0x188] sm:$0xff] %v2118
        %2279 = vst [vmem:[%s342 + $0x190] sm:$0xff] %v2207
        %2280 = vst [vmem:[%s342 + $0x1a0] sm:$0xff] %v2120
        %2281 = vst [vmem:[%s342 + $0x1a8] sm:$0xff] %v2209
        %2282 = vst [vmem:[%s342 + $0x1b8] sm:$0xff] %v2123
        %2283 = vst [vmem:[%s342 + $0x1c0] sm:$0xff] %v2212
        %2284 = vst [vmem:[%s342 + $0x1d0] sm:$0xff] %v2125
        %2285 = vst [vmem:[%s342 + $0x1d8] sm:$0xff] %v2214
        %2286 = vst [vmem:[%s342 + $0x1e8] sm:$0xff] %v2128
        %2287 = vst [vmem:[%s342 + $0x1f0] sm:$0xff] %v2217
        %2288 = vst [vmem:[%s342 + $0x200] sm:$0xff] %v2130
        %2289 = vst [vmem:[%s342 + $0x208] sm:$0xff] %v2219
        %2290 = vst [vmem:[%s342 + $0x218] sm:$0xff] %v2133
        %2291 = vst [vmem:[%s342 + $0x220] sm:$0xff] %v2222
        %2292 = vst [vmem:[%s342 + $0x230] sm:$0xff] %v2135
        %2293 = vst [vmem:[%s342 + $0x238] sm:$0xff] %v2224
        %2294 = vst [vmem:[%s342 + $0x248] sm:$0xff] %v2138
        %2295 = vst [vmem:[%s342 + $0x250] sm:$0xff] %v2227
        %2296 = vst [vmem:[%s342 + $0x260] sm:$0xff] %v2140
        %2297 = vst [vmem:[%s342 + $0x268] sm:$0xff] %v2229
        %2298 = vst [vmem:[%s342 + $0x278] sm:$0xff] %v2143
        %2299 = vst [vmem:[%s342 + $0x280] sm:$0xff] %v2232
        %2300 = vst [vmem:[%s342 + $0x290] sm:$0xff] %v2145
        %2301 = vst [vmem:[%s342 + $0x298] sm:$0xff] %v2234
        %2302 = vst [vmem:[%s342 + $0x2a8] sm:$0xff] %v2148
        %2303 = vst [vmem:[%s342 + $0x2b0] sm:$0xff] %v2237
        %2304 = vst [vmem:[%s342 + $0x2c0] sm:$0xff] %v2150
        %2305 = vst [vmem:[%s342 + $0x2c8] sm:$0xff] %v2239
        %2306 = vst [vmem:[%s342 + $0x2d8] sm:$0xff] %v2153
        %2307 = vst [vmem:[%s342 + $0x2e0] sm:$0xff] %v2242
        %2308 = vst [vmem:[%s342 + $0x2f0] sm:$0xff] %v2155
        %2309 = vst [vmem:[%s342 + $0x2f8] sm:$0xff] %v2244
        %s2310 = sand.u32 %s211, 1
        %s2311 = scalar_lea.sflag [#allocation4], %s2310
        %s2312 = sand.u32 %s211, 1
        %s2313 = smul.addr %s2312, 768
        %s2314 = scalar_lea.vmem [#allocation5], %s2313
        // Predicated region
        $region57: #{tpu_custom_call.1} parent=51 // pred_check
          %p2315 = pneg %p221
        $region58: #{tpu_custom_call.1} parent=51 // pred_check_branch
          %2317 = sbr.rel (%p2315) target = $region60
        $region59: #{tpu_custom_call.1} parent=51 // pred_region
          %s2318 = smul.u32 32, %s25
          %2320 = vsyncadd %s2311, 0
          %s2321 = smul.addr %s2318, 3
          %s2322 = smul.addr %s2321, 8
          %s2323 = scalar_lea.hbm %s8, %s2322
          %s2324 = sshll.u32 %s2314, 4
          %s2325 = int_to_ptr.vmem [resolvable:$true] %s2324
          %s2326 = sshll.u32 %s2323, 4
          %s2327 = int_to_ptr.hbm [resolvable:$true] %s2326
          %2332 = dma.vmem_to_hbm [thread:$0]  %s2325, 12288, %s2327, %s2311, 384, 384, 24
        $region60: #{tpu_custom_call.1} parent=51 // pred_fallthru
          _
      $region52: #{tpu_custom_call.1} parent=5 // pred_fallthru
        _
      %p2333 = scmp.le.s32.totalorder 2, %s20
      // Predicated region
      $region61: #{tpu_custom_call.1} parent=5 // pred_check
        %p2334 = pneg %p2333
      $region62: #{tpu_custom_call.1} parent=5 // pred_check_branch
        %2336 = sbr.rel (%p2334) target = $region64
      $region63: #{tpu_custom_call.1} parent=5 // pred_region
        %s2337 = ssub.s32 %s20, 2
        // Predicated region
        $region65: #{tpu_custom_call.1} parent=63 // pred_check
          %p2338 = pneg %p227
        $region66: #{tpu_custom_call.1} parent=63 // pred_check_branch
          %2340 = sbr.rel (%p2338) target = $region68
        $region67: #{tpu_custom_call.1} parent=63 // pred_region
          %s2341 = sand.u32 %s212, 1
          %s2342 = scalar_lea.sflag [#allocation4], %s2341
          %s2343 = sand.u32 %s212, 1
          %s2344 = smul.addr %s2343, 768
          %s2345 = scalar_lea.vmem [#allocation5], %s2344
          %2347 = dma.done %s2342, 12288
        $region68: #{tpu_custom_call.1} parent=63 // pred_fallthru
          _
      $region64: #{tpu_custom_call.1} parent=5 // pred_fallthru
        _
    $region6: #{tpu_custom_call.1} parent=1 // loop_footer
      %s24 = sadd.s32 1, %s20
    $region7: #{tpu_custom_call.1} parent=1 // loop_footer_branch
      %19 = sbr.rel target = $region3
    $region8: #{tpu_custom_call.1} parent=1 // loop_exit
      _
    %2348 = vsyncpa [#allocation3], 1
    %s2349 = scalar_lea.sflag [#allocation3], 1
    %2350 = vsyncpa %s2349, 1
    %2351 = vsyncpa [#allocation4], 1
    %s2352 = scalar_lea.sflag [#allocation4], 1
    %2353 = vsyncpa %s2352, 1

</llo_original>
